<compile_context>
chip_gen: v7x
topology: tpu7x:2x2x1
jax: 0.10.0
libtpu: 0.0.40
codegen_flags: <defaults>
</compile_context>

<pallas_src>
import jax
import jax.numpy as jnp
from jax.experimental import pallas as pl
from jax.experimental.pallas import tpu as pltpu

TEMPERATURE = 0.07
INV_T = 1.0 / TEMPERATURE
MOMENTUM = 0.999
BN_EPS = 1e-5
L2_EPS = 1e-12


# ---------------------------------------------------------------------------
# Kernel 1: fused branch pipeline (runs once per grid step; step 0 = q, step 1 = k)
#   enc = relu(x @ W_enc + b)
#   h1  = relu( BN_affine(enc @ W1) )
#   z   = BN_noaffine(h1 @ W2)
#   emb = z / max(||z||_2, 1e-12)
# ---------------------------------------------------------------------------
def _branch_kernel(x_ref, ew_ref, eb_ref, w1_ref, g_ref, beta_ref, w2_ref,
                   enc_ref, emb_ref):
    # --- synthetic base encoder: relu(x @ W_enc + b) (bf16 MXU, f32 accumulate) ---
    h = jnp.dot(x_ref[...].astype(jnp.bfloat16),
                ew_ref[...].astype(jnp.bfloat16),
                preferred_element_type=jnp.float32)
    enc = jnp.maximum(h + eb_ref[...], 0.0)
    enc_ref[...] = enc

    # --- projector layer 1: Linear(no bias) -> BatchNorm1d(affine) -> ReLU ---
    h1 = jnp.dot(enc.astype(jnp.bfloat16), w1_ref[...].astype(jnp.bfloat16),
                 preferred_element_type=jnp.float32)
    mu1 = jnp.mean(h1, axis=0, keepdims=True)
    var1 = jnp.mean(h1 * h1, axis=0, keepdims=True) - mu1 * mu1   # one-pass variance
    h1 = (h1 - mu1) * jax.lax.rsqrt(var1 + BN_EPS)
    h1 = jnp.maximum(h1 * g_ref[...] + beta_ref[...], 0.0)

    # --- projector layer 2: Linear(no bias) -> BatchNorm1d(affine=False) ---
    z = jnp.dot(h1.astype(jnp.bfloat16), w2_ref[...].astype(jnp.bfloat16),
                preferred_element_type=jnp.float32)
    mu2 = jnp.mean(z, axis=0, keepdims=True)
    var2 = jnp.mean(z * z, axis=0, keepdims=True) - mu2 * mu2
    z = (z - mu2) * jax.lax.rsqrt(var2 + BN_EPS)

    # --- F.normalize(z, dim=1): z / max(||z||, eps)  via rsqrt ---
    nsq = jnp.sum(z * z, axis=1, keepdims=True)
    emb_ref[...] = z * jax.lax.rsqrt(jnp.maximum(nsq, L2_EPS * L2_EPS))


def dual_branch_forward(x, enc_w, enc_b, w1, gamma, beta, w2):
    """x: (2, N, FEAT); all weights stacked with leading branch axis of size 2."""
    _, n, feat = x.shape
    enc_dim = enc_w.shape[-1]
    mlp_dim = w1.shape[-1]
    dim = w2.shape[-1]
    # NOTE: at ResNet-scale FEAT the encoder contraction should additionally be tiled
    # over a K-reduction grid axis with an f32 accumulator (v7x VMEM budget); at these
    # sizes a single block per branch is optimal.
    enc, emb = pl.pallas_call(
        _branch_kernel,
        out_shape=(jax.ShapeDtypeStruct((2, n, enc_dim), jnp.float32),
                   jax.ShapeDtypeStruct((2, n, dim), jnp.float32)),
        grid=(2,),
        in_specs=[
            pl.BlockSpec((None, n, feat), lambda b: (b, 0, 0)),
            pl.BlockSpec((None, feat, enc_dim), lambda b: (b, 0, 0)),
            pl.BlockSpec((None, 1, enc_dim), lambda b: (b, 0, 0)),
            pl.BlockSpec((None, enc_dim, mlp_dim), lambda b: (b, 0, 0)),
            pl.BlockSpec((None, 1, mlp_dim), lambda b: (b, 0, 0)),
            pl.BlockSpec((None, 1, mlp_dim), lambda b: (b, 0, 0)),
            pl.BlockSpec((None, mlp_dim, dim), lambda b: (b, 0, 0)),
        ],
        out_specs=(
            pl.BlockSpec((None, n, enc_dim), lambda b: (b, 0, 0)),
            pl.BlockSpec((None, n, dim), lambda b: (b, 0, 0)),
        ),
        compiler_params=pltpu.CompilerParams(
            dimension_semantics=("parallel",)),
    )(x, enc_w, enc_b, w1, gamma, beta, w2)
    return enc, emb


# ---------------------------------------------------------------------------
# Kernel 2: contrastive loss, tiled over the queue K axis with online logsumexp
#   l_pos = sum(q*k, -1)/T ; l_neg = (q @ queue^T)/T (contraction, no transpose)
#   loss  = mean_n( logsumexp([l_pos, l_neg]_n) - l_pos_n )
# ---------------------------------------------------------------------------
def _loss_kernel(q_ref, k_ref, queue_ref, loss_ref, m_sc, s_sc, lp_sc):
    j = pl.program_id(0)

    @pl.when(j == 0)
    def _():
        lp = jnp.sum(q_ref[...] * k_ref[...], axis=1, keepdims=True) * INV_T
        lp_sc[...] = lp
        m_sc[...] = lp
        s_sc[...] = jnp.ones_like(lp)          # exp(l_pos - m) with m = l_pos

    # (N, TK) negatives for this queue tile; 'nd,kd->nk' on the MXU, bf16 in / f32 acc.
    ln = jax.lax.dot_general(
        q_ref[...].astype(jnp.bfloat16),
        queue_ref[...].astype(jnp.bfloat16),
        (((1,), (1,)), ((), ())),
        preferred_element_type=jnp.float32) * INV_T

    m_new = jnp.maximum(m_sc[...], jnp.max(ln, axis=1, keepdims=True))
    s_sc[...] = (s_sc[...] * jnp.exp(m_sc[...] - m_new)
                 + jnp.sum(jnp.exp(ln - m_new), axis=1, keepdims=True))
    m_sc[...] = m_new

    @pl.when(j == pl.num_programs(0) - 1)
    def _():
        lse = m_sc[...] + jnp.log(s_sc[...])
        loss_ref[...] = jnp.mean(lse - lp_sc[...], keepdims=True)   # (1, 1)


def moco_loss(q_emb, k_emb, queue, *, queue_tile=256):
    n, dim = q_emb.shape
    kq = queue.shape[0]
    if kq % queue_tile != 0:
        queue_tile = kq
    nk = kq // queue_tile
    out = pl.pallas_call(
        _loss_kernel,
        out_shape=jax.ShapeDtypeStruct((1, 1), jnp.float32),
        grid=(nk,),
        in_specs=[
            pl.BlockSpec((n, dim), lambda j: (0, 0)),
            pl.BlockSpec((n, dim), lambda j: (0, 0)),
            pl.BlockSpec((queue_tile, dim), lambda j: (j, 0)),
        ],
        out_specs=pl.BlockSpec((1, 1), lambda j: (0, 0)),
        scratch_shapes=[
            pltpu.VMEM((n, 1), jnp.float32),   # running max
            pltpu.VMEM((n, 1), jnp.float32),   # running sum of exp
            pltpu.VMEM((n, 1), jnp.float32),   # l_pos
        ],
        compiler_params=pltpu.CompilerParams(
            dimension_semantics=("arbitrary",)),
    )(q_emb, k_emb, queue)
    return out[0, 0]


# ---------------------------------------------------------------------------
# Kernel 3: queue ring-buffer writeback (aliased; only the N updated rows move)
# ---------------------------------------------------------------------------
def _queue_write_kernel(k_ref, q_in_ref, q_out_ref):
    del q_in_ref           # aliased with q_out_ref; untouched rows keep old values
    q_out_ref[...] = k_ref[...]


def queue_update(queue, k_emb, ptr):
    kq, dim = queue.shape
    n = k_emb.shape[0]
    row_block = ptr // n   # static (ptr is a Python int, ptr % n == 0 asserted upstream)
    return pl.pallas_call(
        _queue_write_kernel,
        out_shape=jax.ShapeDtypeStruct((kq, dim), queue.dtype),
        grid=(1,),
        in_specs=[
            pl.BlockSpec((n, dim), lambda i: (0, 0)),
            pl.BlockSpec((n, dim), lambda i: (row_block, 0)),
        ],
        out_specs=pl.BlockSpec((n, dim), lambda i: (row_block, 0)),
        input_output_aliases={1: 0},
    )(k_emb, queue)


# ---------------------------------------------------------------------------
# Full MoCo forward (mirrors MoCo.forward)
# ---------------------------------------------------------------------------
_EMA_PAIRS = [
    ("q_enc_w", "k_enc_w"), ("q_enc_b", "k_enc_b"),
    ("q_w1", "k_w1"), ("q_g", "k_g"), ("q_beta", "k_beta"), ("q_w2", "k_w2"),
]


def moco_forward(params, queue, q_imgs, k_imgs, ptr):
    n = q_imgs.shape[0]
    kq = queue.shape[0]
    # PyTorch MoCo implicitly requires queue_size % batch == 0 (no wraparound handling).
    assert kq % n == 0 and ptr % n == 0, "queue_size must be a multiple of batch size"

    qx = q_imgs.reshape(n, -1).astype(jnp.float32)   # NCHW -> (N, C*H*W)
    kx = k_imgs.reshape(n, -1).astype(jnp.float32)
    x = jnp.stack([qx, kx])                          # (2, N, FEAT)

    enc_w = jnp.stack([params["q_enc_w"], params["k_enc_w"]])
    enc_b = jnp.stack([params["q_enc_b"], params["k_enc_b"]])
    w1 = jnp.stack([params["q_w1"], params["k_w1"]])
    gamma = jnp.stack([params["q_g"], params["k_g"]])
    beta = jnp.stack([params["q_beta"], params["k_beta"]])
    w2 = jnp.stack([params["q_w2"], params["k_w2"]])

    # one fused pallas_call covers both branches: encoder -> projector -> normalize
    enc, emb = dual_branch_forward(x, enc_w, enc_b, w1, gamma, beta, w2)
    q_enc = enc[0]
    q_emb = emb[0]
    k_emb = jax.lax.stop_gradient(emb[1])            # key branch is under no_grad

    loss = moco_loss(q_emb, k_emb, queue)

    # stateful side effects of forward(), expressed functionally
    new_params = dict(params)
    for qn, kn in _EMA_PAIRS:
        new_params[kn] = params[kn] * MOMENTUM + (1.0 - MOMENTUM) * params[qn]
    new_queue = queue_update(queue, k_emb, ptr)      # aliased in-place row write
    new_ptr = (ptr + n) % kq

    # matches `return (loss, q_enc.detach())`; new state returned alongside
    return loss, jax.lax.stop_gradient(q_enc), (new_params, new_queue, new_ptr)


# ---------------------------------------------------------------------------
if __name__ == "__main__":
    key = jax.random.PRNGKey(0)
    N, C, H, W = 8, 4, 16, 16
    FEAT = C * H * W                                  # 1024 (lane-dense)
    ENC_DIM, MLP_DIM, DIM, QUEUE_SIZE = 256, 256, 128, 512

    keys = jax.random.split(key, 8)
    q_imgs = jax.random.normal(keys[0], (N, C, H, W), jnp.float32)
    k_imgs = jax.random.normal(keys[1], (N, C, H, W), jnp.float32)

    # deterministic parameter init (encoder_k / k_fc are deep copies of the q branch)
    enc_w = 0.05 * jax.random.normal(keys[2], (FEAT, ENC_DIM), jnp.float32)
    enc_b = jnp.zeros((1, ENC_DIM), jnp.float32)
    w1 = 0.05 * jax.random.normal(keys[3], (ENC_DIM, MLP_DIM), jnp.float32)
    gamma = jnp.ones((1, MLP_DIM), jnp.float32)       # BatchNorm1d default weight=1
    beta = jnp.zeros((1, MLP_DIM), jnp.float32)       # BatchNorm1d default bias=0
    w2 = 0.05 * jax.random.normal(keys[4], (MLP_DIM, DIM), jnp.float32)

    params = {
        "q_enc_w": enc_w, "q_enc_b": enc_b,
        "q_w1": w1, "q_g": gamma, "q_beta": beta, "q_w2": w2,
        "k_enc_w": enc_w, "k_enc_b": enc_b,
        "k_w1": w1, "k_g": gamma, "k_beta": beta, "k_w2": w2,
    }

    # queue buffer: F.normalize(randn(K, dim), dim=1) / 10
    qraw = jax.random.normal(keys[5], (QUEUE_SIZE, DIM), jnp.float32)
    queue = qraw / jnp.maximum(
        jnp.linalg.norm(qraw, axis=1, keepdims=True), L2_EPS) / 10.0

    # ptr is static (Python int, as in the reference); donate the queue so the aliased
    # ring-buffer update is a true in-place N-row write.
    moco_step = jax.jit(moco_forward, static_argnums=(4,), donate_argnums=(1,))

    loss, q_enc, (new_params, new_queue, new_ptr) = moco_step(
        params, queue, q_imgs, k_imgs, 0)
    jax.block_until_ready((loss, q_enc, new_queue))
    print("KERNEL_OK")
</pallas_src>

<mosaic_0001>
module attributes {stable_mosaic.version = 11 : i64} {
  func.func @_branch_kernel(%arg0: i32, %arg1: memref<1x8x1024xf32, #tpu.memory_space<vmem>>, %arg2: memref<1x1024x256xf32, #tpu.memory_space<vmem>>, %arg3: memref<1x1x256xf32, #tpu.memory_space<vmem>>, %arg4: memref<1x256x256xf32, #tpu.memory_space<vmem>>, %arg5: memref<1x1x256xf32, #tpu.memory_space<vmem>>, %arg6: memref<1x1x256xf32, #tpu.memory_space<vmem>>, %arg7: memref<1x256x128xf32, #tpu.memory_space<vmem>>, %arg8: memref<1x8x256xf32, #tpu.memory_space<vmem>>, %arg9: memref<1x8x128xf32, #tpu.memory_space<vmem>>) attributes {dimension_semantics = [#tpu.dimension_semantics<parallel>], iteration_bounds = array<i64: 2>, scalar_prefetch = 0 : i64, scratch_operands = 0 : i64, tpu.core_type = #tpu.core_type<tc>, window_params = [{transform_indices = @transform_0, window_bounds = array<i64: 1, 8, 1024>}, {transform_indices = @transform_1, window_bounds = array<i64: 1, 1024, 256>}, {transform_indices = @transform_2, window_bounds = array<i64: 1, 1, 256>}, {transform_indices = @transform_3, window_bounds = array<i64: 1, 256, 256>}, {transform_indices = @transform_4, window_bounds = array<i64: 1, 1, 256>}, {transform_indices = @transform_5, window_bounds = array<i64: 1, 1, 256>}, {transform_indices = @transform_6, window_bounds = array<i64: 1, 256, 128>}, {transform_indices = @transform_7, window_bounds = array<i64: 1, 8, 256>}, {transform_indices = @transform_8, window_bounds = array<i64: 1, 8, 128>}]} {
    %c0 = arith.constant 0 : index
    %c0_0 = arith.constant 0 : index
    %c0_1 = arith.constant 0 : index
    %0 = vector.load %arg1[%c0, %c0_0, %c0_1] : memref<1x8x1024xf32, #tpu.memory_space<vmem>>, vector<1x8x1024xf32>
    %1 = vector.shape_cast %0 : vector<1x8x1024xf32> to vector<8x1024xf32>
    %2 = arith.truncf %1 : vector<8x1024xf32> to vector<8x1024xbf16>
    %c0_2 = arith.constant 0 : index
    %c0_3 = arith.constant 0 : index
    %c0_4 = arith.constant 0 : index
    %3 = vector.load %arg2[%c0_2, %c0_3, %c0_4] : memref<1x1024x256xf32, #tpu.memory_space<vmem>>, vector<1x1024x256xf32>
    %4 = vector.shape_cast %3 : vector<1x1024x256xf32> to vector<1024x256xf32>
    %5 = arith.truncf %4 : vector<1024x256xf32> to vector<1024x256xbf16>
    %cst = arith.constant dense<0.000000e+00> : vector<8x256xf32>
    %6 = tpu.matmul %2, %5, %cst {dimension_numbers = #tpu.dot_dimension_numbers<[1], [0], [0], [1], [0, 0, 1, 1], [], []>} : vector<8x1024xbf16>, vector<1024x256xbf16>, vector<8x256xf32> -> vector<8x256xf32>
    %c0_5 = arith.constant 0 : index
    %c0_6 = arith.constant 0 : index
    %c0_7 = arith.constant 0 : index
    %7 = vector.load %arg3[%c0_5, %c0_6, %c0_7] : memref<1x1x256xf32, #tpu.memory_space<vmem>>, vector<1x1x256xf32>
    %8 = vector.shape_cast %7 : vector<1x1x256xf32> to vector<1x256xf32>
    %9 = vector.broadcast %8 : vector<1x256xf32> to vector<8x256xf32>
    %10 = arith.addf %6, %9 : vector<8x256xf32>
    %cst_8 = arith.constant 0.000000e+00 : f32
    %11 = vector.broadcast %cst_8 : f32 to vector<8x256xf32>
    %12 = arith.maximumf %10, %11 : vector<8x256xf32>
    %c0_9 = arith.constant 0 : index
    %c0_10 = arith.constant 0 : index
    %c0_11 = arith.constant 0 : index
    %13 = vector.load %arg8[%c0_9, %c0_10, %c0_11] : memref<1x8x256xf32, #tpu.memory_space<vmem>>, vector<1x8x256xf32>
    %14 = vector.shape_cast %13 : vector<1x8x256xf32> to vector<8x256xf32>
    %15 = vector.shape_cast %12 : vector<8x256xf32> to vector<1x8x256xf32>
    tpu.vector_store %arg8[%c0_9, %c0_10, %c0_11], %15 {strides = array<i32>} : memref<1x8x256xf32, #tpu.memory_space<vmem>>, vector<1x8x256xf32>,
    %16 = arith.truncf %12 : vector<8x256xf32> to vector<8x256xbf16>
    %c0_12 = arith.constant 0 : index
    %c0_13 = arith.constant 0 : index
    %c0_14 = arith.constant 0 : index
    %17 = vector.load %arg4[%c0_12, %c0_13, %c0_14] : memref<1x256x256xf32, #tpu.memory_space<vmem>>, vector<1x256x256xf32>
    %18 = vector.shape_cast %17 : vector<1x256x256xf32> to vector<256x256xf32>
    %19 = arith.truncf %18 : vector<256x256xf32> to vector<256x256xbf16>
    %cst_15 = arith.constant dense<0.000000e+00> : vector<8x256xf32>
    %20 = tpu.matmul %16, %19, %cst_15 {dimension_numbers = #tpu.dot_dimension_numbers<[1], [0], [0], [1], [0, 0, 1, 1], [], []>} : vector<8x256xbf16>, vector<256x256xbf16>, vector<8x256xf32> -> vector<8x256xf32>
    %cst_16 = arith.constant dense<0.000000e+00> : vector<256xf32>
    %21 = vector.multi_reduction <add>, %20, %cst_16 [0] : vector<8x256xf32> to vector<256xf32>
    %22 = vector.shape_cast %21 : vector<256xf32> to vector<1x256xf32>
    %cst_17 = arith.constant 8.000000e+00 : f32
    %23 = vector.broadcast %cst_17 : f32 to vector<1x256xf32>
    %24 = arith.divf %22, %23 : vector<1x256xf32>
    %25 = arith.mulf %20, %20 : vector<8x256xf32>
    %cst_18 = arith.constant dense<0.000000e+00> : vector<256xf32>
    %26 = vector.multi_reduction <add>, %25, %cst_18 [0] : vector<8x256xf32> to vector<256xf32>
    %27 = vector.shape_cast %26 : vector<256xf32> to vector<1x256xf32>
    %cst_19 = arith.constant 8.000000e+00 : f32
    %28 = vector.broadcast %cst_19 : f32 to vector<1x256xf32>
    %29 = arith.divf %27, %28 : vector<1x256xf32>
    %30 = arith.mulf %24, %24 : vector<1x256xf32>
    %31 = arith.subf %29, %30 : vector<1x256xf32>
    %32 = vector.broadcast %24 : vector<1x256xf32> to vector<8x256xf32>
    %33 = arith.subf %20, %32 : vector<8x256xf32>
    %cst_20 = arith.constant 9.99999974E-6 : f32
    %34 = vector.broadcast %cst_20 : f32 to vector<1x256xf32>
    %35 = arith.addf %31, %34 : vector<1x256xf32>
    %36 = math.rsqrt %35 : vector<1x256xf32>
    %37 = vector.broadcast %36 : vector<1x256xf32> to vector<8x256xf32>
    %38 = arith.mulf %33, %37 : vector<8x256xf32>
    %c0_21 = arith.constant 0 : index
    %c0_22 = arith.constant 0 : index
    %c0_23 = arith.constant 0 : index
    %39 = vector.load %arg5[%c0_21, %c0_22, %c0_23] : memref<1x1x256xf32, #tpu.memory_space<vmem>>, vector<1x1x256xf32>
    %40 = vector.shape_cast %39 : vector<1x1x256xf32> to vector<1x256xf32>
    %41 = vector.broadcast %40 : vector<1x256xf32> to vector<8x256xf32>
    %42 = arith.mulf %38, %41 : vector<8x256xf32>
    %c0_24 = arith.constant 0 : index
    %c0_25 = arith.constant 0 : index
    %c0_26 = arith.constant 0 : index
    %43 = vector.load %arg6[%c0_24, %c0_25, %c0_26] : memref<1x1x256xf32, #tpu.memory_space<vmem>>, vector<1x1x256xf32>
    %44 = vector.shape_cast %43 : vector<1x1x256xf32> to vector<1x256xf32>
    %45 = vector.broadcast %44 : vector<1x256xf32> to vector<8x256xf32>
    %46 = arith.addf %42, %45 : vector<8x256xf32>
    %cst_27 = arith.constant 0.000000e+00 : f32
    %47 = vector.broadcast %cst_27 : f32 to vector<8x256xf32>
    %48 = arith.maximumf %46, %47 : vector<8x256xf32>
    %49 = arith.truncf %48 : vector<8x256xf32> to vector<8x256xbf16>
    %c0_28 = arith.constant 0 : index
    %c0_29 = arith.constant 0 : index
    %c0_30 = arith.constant 0 : index
    %50 = vector.load %arg7[%c0_28, %c0_29, %c0_30] : memref<1x256x128xf32, #tpu.memory_space<vmem>>, vector<1x256x128xf32>
    %51 = vector.shape_cast %50 : vector<1x256x128xf32> to vector<256x128xf32>
    %52 = arith.truncf %51 : vector<256x128xf32> to vector<256x128xbf16>
    %cst_31 = arith.constant dense<0.000000e+00> : vector<8x128xf32>
    %53 = tpu.matmul %49, %52, %cst_31 {dimension_numbers = #tpu.dot_dimension_numbers<[1], [0], [0], [1], [0, 0, 1, 1], [], []>} : vector<8x256xbf16>, vector<256x128xbf16>, vector<8x128xf32> -> vector<8x128xf32>
    %cst_32 = arith.constant dense<0.000000e+00> : vector<128xf32>
    %54 = vector.multi_reduction <add>, %53, %cst_32 [0] : vector<8x128xf32> to vector<128xf32>
    %55 = vector.shape_cast %54 : vector<128xf32> to vector<1x128xf32>
    %cst_33 = arith.constant 8.000000e+00 : f32
    %56 = vector.broadcast %cst_33 : f32 to vector<1x128xf32>
    %57 = arith.divf %55, %56 : vector<1x128xf32>
    %58 = arith.mulf %53, %53 : vector<8x128xf32>
    %cst_34 = arith.constant dense<0.000000e+00> : vector<128xf32>
    %59 = vector.multi_reduction <add>, %58, %cst_34 [0] : vector<8x128xf32> to vector<128xf32>
    %60 = vector.shape_cast %59 : vector<128xf32> to vector<1x128xf32>
    %cst_35 = arith.constant 8.000000e+00 : f32
    %61 = vector.broadcast %cst_35 : f32 to vector<1x128xf32>
    %62 = arith.divf %60, %61 : vector<1x128xf32>
    %63 = arith.mulf %57, %57 : vector<1x128xf32>
    %64 = arith.subf %62, %63 : vector<1x128xf32>
    %65 = vector.broadcast %57 : vector<1x128xf32> to vector<8x128xf32>
    %66 = arith.subf %53, %65 : vector<8x128xf32>
    %cst_36 = arith.constant 9.99999974E-6 : f32
    %67 = vector.broadcast %cst_36 : f32 to vector<1x128xf32>
    %68 = arith.addf %64, %67 : vector<1x128xf32>
    %69 = math.rsqrt %68 : vector<1x128xf32>
    %70 = vector.broadcast %69 : vector<1x128xf32> to vector<8x128xf32>
    %71 = arith.mulf %66, %70 : vector<8x128xf32>
    %72 = arith.mulf %71, %71 : vector<8x128xf32>
    %cst_37 = arith.constant dense<0.000000e+00> : vector<8xf32>
    %73 = vector.multi_reduction <add>, %72, %cst_37 [1] : vector<8x128xf32> to vector<8xf32>
    %74 = vector.shape_cast %73 : vector<8xf32> to vector<8x1xf32>
    %cst_38 = arith.constant 1.000000e-24 : f32
    %75 = vector.broadcast %cst_38 : f32 to vector<8x1xf32>
    %76 = arith.maximumf %74, %75 : vector<8x1xf32>
    %77 = math.rsqrt %76 : vector<8x1xf32>
    %78 = vector.broadcast %77 : vector<8x1xf32> to vector<8x128xf32>
    %79 = arith.mulf %71, %78 : vector<8x128xf32>
    %c0_39 = arith.constant 0 : index
    %c0_40 = arith.constant 0 : index
    %c0_41 = arith.constant 0 : index
    %80 = vector.load %arg9[%c0_39, %c0_40, %c0_41] : memref<1x8x128xf32, #tpu.memory_space<vmem>>, vector<1x8x128xf32>
    %81 = vector.shape_cast %80 : vector<1x8x128xf32> to vector<8x128xf32>
    %82 = vector.shape_cast %79 : vector<8x128xf32> to vector<1x8x128xf32>
    tpu.vector_store %arg9[%c0_39, %c0_40, %c0_41], %82 {strides = array<i32>} : memref<1x8x128xf32, #tpu.memory_space<vmem>>, vector<1x8x128xf32>,
    return
  }
  func.func @transform_0(%arg0: i32) -> (i32, i32, i32) {
    %c0_i32 = arith.constant 0 : i32
    %c0_i32_0 = arith.constant 0 : i32
    %c0_i32_1 = arith.constant 0 : i32
    return %arg0, %c0_i32, %c0_i32_0 : i32, i32, i32
  }
  func.func @transform_1(%arg0: i32) -> (i32, i32, i32) {
    %c0_i32 = arith.constant 0 : i32
    %c0_i32_0 = arith.constant 0 : i32
    %c0_i32_1 = arith.constant 0 : i32
    return %arg0, %c0_i32, %c0_i32_0 : i32, i32, i32
  }
  func.func @transform_2(%arg0: i32) -> (i32, i32, i32) {
    %c0_i32 = arith.constant 0 : i32
    %c0_i32_0 = arith.constant 0 : i32
    %c0_i32_1 = arith.constant 0 : i32
    return %arg0, %c0_i32, %c0_i32_0 : i32, i32, i32
  }
  func.func @transform_3(%arg0: i32) -> (i32, i32, i32) {
    %c0_i32 = arith.constant 0 : i32
    %c0_i32_0 = arith.constant 0 : i32
    %c0_i32_1 = arith.constant 0 : i32
    return %arg0, %c0_i32, %c0_i32_0 : i32, i32, i32
  }
  func.func @transform_4(%arg0: i32) -> (i32, i32, i32) {
    %c0_i32 = arith.constant 0 : i32
    %c0_i32_0 = arith.constant 0 : i32
    %c0_i32_1 = arith.constant 0 : i32
    return %arg0, %c0_i32, %c0_i32_0 : i32, i32, i32
  }
  func.func @transform_5(%arg0: i32) -> (i32, i32, i32) {
    %c0_i32 = arith.constant 0 : i32
    %c0_i32_0 = arith.constant 0 : i32
    %c0_i32_1 = arith.constant 0 : i32
    return %arg0, %c0_i32, %c0_i32_0 : i32, i32, i32
  }
  func.func @transform_6(%arg0: i32) -> (i32, i32, i32) {
    %c0_i32 = arith.constant 0 : i32
    %c0_i32_0 = arith.constant 0 : i32
    %c0_i32_1 = arith.constant 0 : i32
    return %arg0, %c0_i32, %c0_i32_0 : i32, i32, i32
  }
  func.func @transform_7(%arg0: i32) -> (i32, i32, i32) {
    %c0_i32 = arith.constant 0 : i32
    %c0_i32_0 = arith.constant 0 : i32
    %c0_i32_1 = arith.constant 0 : i32
    return %arg0, %c0_i32, %c0_i32_0 : i32, i32, i32
  }
  func.func @transform_8(%arg0: i32) -> (i32, i32, i32) {
    %c0_i32 = arith.constant 0 : i32
    %c0_i32_0 = arith.constant 0 : i32
    %c0_i32_1 = arith.constant 0 : i32
    return %arg0, %c0_i32, %c0_i32_0 : i32, i32, i32
  }
}

module attributes {stable_mosaic.version = 11 : i64} {
  func.func @_loss_kernel(%arg0: i32, %arg1: memref<8x128xf32, #tpu.memory_space<vmem>>, %arg2: memref<8x128xf32, #tpu.memory_space<vmem>>, %arg3: memref<256x128xf32, #tpu.memory_space<vmem>>, %arg4: memref<1x1xf32, #tpu.memory_space<vmem>>, %arg5: memref<8x1xf32, #tpu.memory_space<vmem>>, %arg6: memref<8x1xf32, #tpu.memory_space<vmem>>, %arg7: memref<8x1xf32, #tpu.memory_space<vmem>>) attributes {dimension_semantics = [#tpu.dimension_semantics<arbitrary>], iteration_bounds = array<i64: 2>, scalar_prefetch = 0 : i64, scratch_operands = 3 : i64, tpu.core_type = #tpu.core_type<tc>, window_params = [{pipeline_mode = #tpu.pipeline_mode<synchronous>, transform_indices = @transform_0, window_bounds = array<i64: 8, 128>}, {pipeline_mode = #tpu.pipeline_mode<synchronous>, transform_indices = @transform_1, window_bounds = array<i64: 8, 128>}, {transform_indices = @transform_2, window_bounds = array<i64: 256, 128>}, {pipeline_mode = #tpu.pipeline_mode<synchronous>, transform_indices = @transform_3, window_bounds = array<i64: 1, 1>}]} {
    %c0_i32 = arith.constant 0 : i32
    %0 = arith.cmpi eq, %arg0, %c0_i32 : i32
    %1 = arith.extui %0 : i1 to i32
    %c0_i32_0 = arith.constant 0 : i32
    %2 = arith.cmpi ne, %1, %c0_i32_0 : i32
    scf.if %2 {
      %c0_18 = arith.constant 0 : index
      %c0_19 = arith.constant 0 : index
      %30 = vector.load %arg1[%c0_18, %c0_19] : memref<8x128xf32, #tpu.memory_space<vmem>>, vector<8x128xf32>
      %c0_20 = arith.constant 0 : index
      %c0_21 = arith.constant 0 : index
      %31 = vector.load %arg2[%c0_20, %c0_21] : memref<8x128xf32, #tpu.memory_space<vmem>>, vector<8x128xf32>
      %32 = arith.mulf %30, %31 : vector<8x128xf32>
      %cst_22 = arith.constant dense<0.000000e+00> : vector<8xf32>
      %33 = vector.multi_reduction <add>, %32, %cst_22 [1] : vector<8x128xf32> to vector<8xf32>
      %34 = vector.shape_cast %33 : vector<8xf32> to vector<8x1xf32>
      %cst_23 = arith.constant 14.2857141 : f32
      %35 = vector.broadcast %cst_23 : f32 to vector<8x1xf32>
      %36 = arith.mulf %34, %35 : vector<8x1xf32>
      %c0_24 = arith.constant 0 : index
      %c0_25 = arith.constant 0 : index
      %37 = vector.load %arg7[%c0_24, %c0_25] : memref<8x1xf32, #tpu.memory_space<vmem>>, vector<8x1xf32>
      tpu.vector_store %arg7[%c0_24, %c0_25], %36 {strides = array<i32>} : memref<8x1xf32, #tpu.memory_space<vmem>>, vector<8x1xf32>,
      %c0_26 = arith.constant 0 : index
      %c0_27 = arith.constant 0 : index
      %38 = vector.load %arg5[%c0_26, %c0_27] : memref<8x1xf32, #tpu.memory_space<vmem>>, vector<8x1xf32>
      tpu.vector_store %arg5[%c0_26, %c0_27], %36 {strides = array<i32>} : memref<8x1xf32, #tpu.memory_space<vmem>>, vector<8x1xf32>,
      %cst_28 = arith.constant 1.000000e+00 : f32
      %39 = vector.broadcast %cst_28 : f32 to vector<8x1xf32>
      %c0_29 = arith.constant 0 : index
      %c0_30 = arith.constant 0 : index
      %40 = vector.load %arg6[%c0_29, %c0_30] : memref<8x1xf32, #tpu.memory_space<vmem>>, vector<8x1xf32>
      tpu.vector_store %arg6[%c0_29, %c0_30], %39 {strides = array<i32>} : memref<8x1xf32, #tpu.memory_space<vmem>>, vector<8x1xf32>,
    } else {
    }
    %c0 = arith.constant 0 : index
    %c0_1 = arith.constant 0 : index
    %3 = vector.load %arg1[%c0, %c0_1] : memref<8x128xf32, #tpu.memory_space<vmem>>, vector<8x128xf32>
    %4 = arith.truncf %3 : vector<8x128xf32> to vector<8x128xbf16>
    %c0_2 = arith.constant 0 : index
    %c0_3 = arith.constant 0 : index
    %5 = vector.load %arg3[%c0_2, %c0_3] : memref<256x128xf32, #tpu.memory_space<vmem>>, vector<256x128xf32>
    %6 = arith.truncf %5 : vector<256x128xf32> to vector<256x128xbf16>
    %cst = arith.constant dense<0.000000e+00> : vector<8x256xf32>
    %7 = tpu.matmul %4, %6, %cst {dimension_numbers = #tpu.dot_dimension_numbers<[1], [1], [0], [0], [0, 0, 1, 0], [], []>} : vector<8x128xbf16>, vector<256x128xbf16>, vector<8x256xf32> -> vector<8x256xf32>
    %cst_4 = arith.constant 14.2857141 : f32
    %8 = vector.broadcast %cst_4 : f32 to vector<8x256xf32>
    %9 = arith.mulf %7, %8 : vector<8x256xf32>
    %c0_5 = arith.constant 0 : index
    %c0_6 = arith.constant 0 : index
    %10 = vector.load %arg5[%c0_5, %c0_6] : memref<8x1xf32, #tpu.memory_space<vmem>>, vector<8x1xf32>
    %cst_7 = arith.constant dense<0xFF800000> : vector<8xf32>
    %11 = vector.multi_reduction <maximumf>, %9, %cst_7 [1] : vector<8x256xf32> to vector<8xf32>
    %12 = vector.shape_cast %11 : vector<8xf32> to vector<8x1xf32>
    %13 = arith.maximumf %10, %12 : vector<8x1xf32>
    %c0_8 = arith.constant 0 : index
    %c0_9 = arith.constant 0 : index
    %14 = vector.load %arg6[%c0_8, %c0_9] : memref<8x1xf32, #tpu.memory_space<vmem>>, vector<8x1xf32>
    %c0_10 = arith.constant 0 : index
    %c0_11 = arith.constant 0 : index
    %15 = vector.load %arg5[%c0_10, %c0_11] : memref<8x1xf32, #tpu.memory_space<vmem>>, vector<8x1xf32>
    %16 = arith.subf %15, %13 : vector<8x1xf32>
    %17 = math.exp %16 : vector<8x1xf32>
    %18 = arith.mulf %14, %17 : vector<8x1xf32>
    %19 = vector.broadcast %13 : vector<8x1xf32> to vector<8x256xf32>
    %20 = arith.subf %9, %19 : vector<8x256xf32>
    %21 = math.exp %20 : vector<8x256xf32>
    %cst_12 = arith.constant dense<0.000000e+00> : vector<8xf32>
    %22 = vector.multi_reduction <add>, %21, %cst_12 [1] : vector<8x256xf32> to vector<8xf32>
    %23 = vector.shape_cast %22 : vector<8xf32> to vector<8x1xf32>
    %24 = arith.addf %18, %23 : vector<8x1xf32>
    %c0_13 = arith.constant 0 : index
    %c0_14 = arith.constant 0 : index
    %25 = vector.load %arg6[%c0_13, %c0_14] : memref<8x1xf32, #tpu.memory_space<vmem>>, vector<8x1xf32>
    tpu.vector_store %arg6[%c0_13, %c0_14], %24 {strides = array<i32>} : memref<8x1xf32, #tpu.memory_space<vmem>>, vector<8x1xf32>,
    %c0_15 = arith.constant 0 : index
    %c0_16 = arith.constant 0 : index
    %26 = vector.load %arg5[%c0_15, %c0_16] : memref<8x1xf32, #tpu.memory_space<vmem>>, vector<8x1xf32>
    tpu.vector_store %arg5[%c0_15, %c0_16], %13 {strides = array<i32>} : memref<8x1xf32, #tpu.memory_space<vmem>>, vector<8x1xf32>,
    %c1_i32 = arith.constant 1 : i32
    %27 = arith.cmpi eq, %arg0, %c1_i32 : i32
    %28 = arith.extui %27 : i1 to i32
    %c0_i32_17 = arith.constant 0 : i32
    %29 = arith.cmpi ne, %28, %c0_i32_17 : i32
    scf.if %29 {
      %c0_18 = arith.constant 0 : index
      %c0_19 = arith.constant 0 : index
      %30 = vector.load %arg5[%c0_18, %c0_19] : memref<8x1xf32, #tpu.memory_space<vmem>>, vector<8x1xf32>
      %c0_20 = arith.constant 0 : index
      %c0_21 = arith.constant 0 : index
      %31 = vector.load %arg6[%c0_20, %c0_21] : memref<8x1xf32, #tpu.memory_space<vmem>>, vector<8x1xf32>
      %32 = math.log %31 : vector<8x1xf32>
      %33 = arith.addf %30, %32 : vector<8x1xf32>
      %c0_22 = arith.constant 0 : index
      %c0_23 = arith.constant 0 : index
      %34 = vector.load %arg7[%c0_22, %c0_23] : memref<8x1xf32, #tpu.memory_space<vmem>>, vector<8x1xf32>
      %35 = arith.subf %33, %34 : vector<8x1xf32>
      %36 = vector.shape_cast %35 : vector<8x1xf32> to vector<1x8x1xf32>
      %cst_24 = arith.constant dense<0.000000e+00> : vector<1xf32>
      %37 = vector.multi_reduction <add>, %36, %cst_24 [1, 2] : vector<1x8x1xf32> to vector<1xf32>
      %38 = vector.shape_cast %37 : vector<1xf32> to vector<1x1x1xf32>
      %39 = vector.extract %38[0, 0, 0] : f32 from vector<1x1x1xf32>
      %40 = vector.broadcast %39 : f32 to vector<1x1xf32>
      %cst_25 = arith.constant 8.000000e+00 : f32
      %41 = vector.broadcast %cst_25 : f32 to vector<1x1xf32>
      %42 = arith.divf %40, %41 : vector<1x1xf32>
      %c0_26 = arith.constant 0 : index
      %c0_27 = arith.constant 0 : index
      %43 = vector.load %arg4[%c0_26, %c0_27] : memref<1x1xf32, #tpu.memory_space<vmem>>, vector<1x1xf32>
      tpu.vector_store %arg4[%c0_26, %c0_27], %42 {strides = array<i32>} : memref<1x1xf32, #tpu.memory_space<vmem>>, vector<1x1xf32>,
    } else {
    }
    return
  }
  func.func @transform_0(%arg0: i32) -> (i32, i32) {
    %c0_i32 = arith.constant 0 : i32
    %c0_i32_0 = arith.constant 0 : i32
    %c0_i32_1 = arith.constant 0 : i32
    return %c0_i32, %c0_i32_0 : i32, i32
  }
  func.func @transform_1(%arg0: i32) -> (i32, i32) {
    %c0_i32 = arith.constant 0 : i32
    %c0_i32_0 = arith.constant 0 : i32
    %c0_i32_1 = arith.constant 0 : i32
    return %c0_i32, %c0_i32_0 : i32, i32
  }
  func.func @transform_2(%arg0: i32) -> (i32, i32) {
    %c0_i32 = arith.constant 0 : i32
    %c0_i32_0 = arith.constant 0 : i32
    return %arg0, %c0_i32 : i32, i32
  }
  func.func @transform_3(%arg0: i32) -> (i32, i32) {
    %c0_i32 = arith.constant 0 : i32
    %c0_i32_0 = arith.constant 0 : i32
    %c0_i32_1 = arith.constant 0 : i32
    return %c0_i32, %c0_i32_0 : i32, i32
  }
}

module attributes {stable_mosaic.version = 11 : i64} {
  func.func @_queue_write_kernel(%arg0: i32, %arg1: memref<8x128xf32, #tpu.memory_space<vmem>>, %arg2: memref<8x128xf32, #tpu.memory_space<vmem>>, %arg3: memref<8x128xf32, #tpu.memory_space<vmem>>) attributes {dimension_semantics = [#tpu.dimension_semantics<arbitrary>], iteration_bounds = array<i64: 1>, scalar_prefetch = 0 : i64, scratch_operands = 0 : i64, tpu.core_type = #tpu.core_type<tc>, window_params = [{pipeline_mode = #tpu.pipeline_mode<synchronous>, transform_indices = @transform_0, window_bounds = array<i64: 8, 128>}, {transform_indices = @transform_1, window_bounds = array<i64: 8, 128>}, {transform_indices = @transform_2, window_bounds = array<i64: 8, 128>}]} {
    %c0 = arith.constant 0 : index
    %c0_0 = arith.constant 0 : index
    %0 = vector.load %arg1[%c0, %c0_0] : memref<8x128xf32, #tpu.memory_space<vmem>>, vector<8x128xf32>
    %c0_1 = arith.constant 0 : index
    %c0_2 = arith.constant 0 : index
    %1 = vector.load %arg3[%c0_1, %c0_2] : memref<8x128xf32, #tpu.memory_space<vmem>>, vector<8x128xf32>
    tpu.vector_store %arg3[%c0_1, %c0_2], %0 {strides = array<i32>} : memref<8x128xf32, #tpu.memory_space<vmem>>, vector<8x128xf32>,
    return
  }
  func.func @transform_0(%arg0: i32) -> (i32, i32) {
    %c0_i32 = arith.constant 0 : i32
    %c0_i32_0 = arith.constant 0 : i32
    %c0_i32_1 = arith.constant 0 : i32
    return %c0_i32, %c0_i32_0 : i32, i32
  }
  func.func @transform_1(%arg0: i32) -> (i32, i32) {
    %c0_i32 = arith.constant 0 : i32
    %c0_i32_0 = arith.constant 0 : i32
    %c0_i32_1 = arith.constant 0 : i32
    return %c0_i32, %c0_i32_0 : i32, i32
  }
  func.func @transform_2(%arg0: i32) -> (i32, i32) {
    %c0_i32 = arith.constant 0 : i32
    %c0_i32_0 = arith.constant 0 : i32
    %c0_i32_1 = arith.constant 0 : i32
    return %c0_i32, %c0_i32_0 : i32, i32
  }
}

</mosaic_0001>

<llo_original>
// kernel: moco_forward.4
$region0: #{moco_forward.4}
  #allocation0 [shape = 'u32[]', space=smem, size = 0x4, offset = 0x4, fixed_abs, tag = 'smem constant byte address 0x4 - core index']
  #allocation1 [shape = 'u32[144,128]{1,0:T(1,128)}', space=vmem, size = 0x12000, scoped, tag = 'internal scratch']
  #allocation2 [shape = 'f32[8,1]{1,0:T(8,128)}', space=vmem, size = 0x1000, scoped, tag = 'scratch operand']
  #allocation3 [shape = 'f32[8,1]{1,0:T(8,128)}', space=vmem, size = 0x1000, scoped, tag = 'scratch operand']
  #allocation4 [shape = 'f32[8,1]{1,0:T(8,128)}', space=vmem, size = 0x1000, scoped, tag = 'scratch operand']
  %s0 = inlined_call_operand.vmem [shape: f32[8,128], index: 0, kind: input, shape index: {}]
  %s1 = inlined_call_operand.vmem [shape: f32[8,128], index: 1, kind: input, shape index: {}]
  %s2 = inlined_call_operand.vmem [shape: f32[512,128], index: 2, kind: input, shape index: {}]
  %s3 = inlined_call_operand.hbm [shape: f32[1,1], index: 3, kind: output, shape index: {}]
  %s4 = sld [smem:[#allocation0]]
  $region53: #{moco_forward.4} parent=0
    _
  %s6 = ssub.s32 1, %s4
  %s7 = scalar_select 0, %s6, %s4
  $region1: #{moco_forward.4} parent=0
    #allocation5 [shape = 'u8[512]{0}', space=vmem, size = 0x400, scoped, tag = 'output window, operand 0, single buffered']
    #allocation6 [shape = 's32[2]{0}', space=sflag, size = 0x8, scoped, tag = 'scoped memory for moco_forward.4']
    %8 = vsyncpa [#allocation6], 0
    loop: start=0, step=1, limit=4
    $region2: #{moco_forward.4} parent=1 // loop_pre_header
      _
    $region3: #{moco_forward.4} parent=1 // loop_header
      %s10 = sphi 0, %s14
      %p11 = scmp.ge.s32.totalorder %s10, 4
      %s18 = sphi 0, %s18
      %s20 = sphi 0, %s18
      %s21 = sphi 0, %s20
      %s35 = sphi 0, %s21
      %s39 = sphi 0, %s39
      %s41 = sphi 0, %s39
      %s42 = sphi 0, %s41
      %s56 = sphi 0, %s42
      %s62 = sphi 0, %s64
      %s65 = sphi 0, %s62
      %s66 = sphi 0, %s65
      %s82 = sphi 0, %s66
      %s86 = sphi 0, %s86
      %s88 = sphi 0, %s86
      %s89 = sphi 0, %s88
      %s103 = sphi 0, %s89
    $region4: #{moco_forward.4} parent=1 // loop_header_branch
      %13 = sbr.rel (%p11) target = $region8
    $region5: #{moco_forward.4} parent=1 // loop_body
      %s15 = ssub.s32 %s10, 1
      %s16 = ssub.s32 %s10, 2
      %s17 = sadd.s32 %s10, 1
      %s19 = sadd.s32 %s18, 1
      %p22 = scmp.eq.s32.totalorder %s10, 1
      %p23 = scmp.ne.s32.totalorder %s18, %s20
      %p24 = scmp.eq.s32.totalorder %s10, 0
      %p25 = por %p23, %p24
      %p26 = scmp.ne.s32.totalorder %s18, %s20
      %p27 = scmp.eq.s32.totalorder %s15, 1
      %p28 = por %p26, %p27
      %p29 = scmp.ne.s32.totalorder %s20, %s21
      %p30 = scmp.eq.s32.totalorder %s15, 0
      %p31 = por %p29, %p30
      %p32 = scmp.ne.s32.totalorder %s20, %s21
      %p33 = scmp.eq.s32.totalorder %s16, 1
      %p34 = por %p32, %p33
      %p36 = scmp.ne.s32.totalorder %s21, %s35
      %p37 = scmp.eq.s32.totalorder %s16, 0
      %p38 = por %p36, %p37
      %s40 = sadd.s32 %s39, 1
      %p43 = scmp.eq.s32.totalorder %s10, 1
      %p44 = scmp.ne.s32.totalorder %s39, %s41
      %p45 = scmp.eq.s32.totalorder %s10, 0
      %p46 = por %p44, %p45
      %p47 = scmp.ne.s32.totalorder %s39, %s41
      %p48 = scmp.eq.s32.totalorder %s15, 1
      %p49 = por %p47, %p48
      %p50 = scmp.ne.s32.totalorder %s41, %s42
      %p51 = scmp.eq.s32.totalorder %s15, 0
      %p52 = por %p50, %p51
      %p53 = scmp.ne.s32.totalorder %s41, %s42
      %p54 = scmp.eq.s32.totalorder %s16, 1
      %p55 = por %p53, %p54
      %p57 = scmp.ne.s32.totalorder %s42, %s56
      %p58 = scmp.eq.s32.totalorder %s16, 0
      %p59 = por %p57, %p58
      %s60 = ssub.s32 %s10, %s17
      %p61 = scmp.eq.s32.totalorder %s60, 0
      %s63 = sadd.s32 %s62, 1
      %s64 = scalar_select %p61, %s62, %s63
      %p67 = pneg %p61
      %p68 = scmp.eq.s32.totalorder %s10, 1
      %p69 = por %p67, %p68
      %p70 = scmp.ne.s32.totalorder %s62, %s65
      %p71 = scmp.eq.s32.totalorder %s10, 0
      %p72 = por %p70, %p71
      %p73 = scmp.ne.s32.totalorder %s62, %s65
      %p74 = scmp.eq.s32.totalorder %s15, 1
      %p75 = por %p73, %p74
      %p76 = scmp.ne.s32.totalorder %s65, %s66
      %p77 = scmp.eq.s32.totalorder %s15, 0
      %p78 = por %p76, %p77
      %p79 = scmp.ne.s32.totalorder %s65, %s66
      %p80 = scmp.eq.s32.totalorder %s16, 1
      %p81 = por %p79, %p80
      %p83 = scmp.ne.s32.totalorder %s66, %s82
      %p84 = scmp.eq.s32.totalorder %s16, 0
      %p85 = por %p83, %p84
      %s87 = sadd.s32 %s86, 1
      %p90 = scmp.eq.s32.totalorder %s10, 1
      %p91 = scmp.ne.s32.totalorder %s86, %s88
      %p92 = scmp.eq.s32.totalorder %s10, 0
      %p93 = por %p91, %p92
      %p94 = scmp.ne.s32.totalorder %s86, %s88
      %p95 = scmp.eq.s32.totalorder %s15, 1
      %p96 = por %p94, %p95
      %p97 = scmp.ne.s32.totalorder %s88, %s89
      %p98 = scmp.eq.s32.totalorder %s15, 0
      %p99 = por %p97, %p98
      %p100 = scmp.ne.s32.totalorder %s88, %s89
      %p101 = scmp.eq.s32.totalorder %s16, 1
      %p102 = por %p100, %p101
      %p104 = scmp.ne.s32.totalorder %s89, %s103
      %p105 = scmp.eq.s32.totalorder %s16, 0
      %p106 = por %p104, %p105
      %p107 = scmp.le.s32.totalorder 1, %s10
      %p108 = scmp.lt.s32.totalorder %s10, 3
      %p109 = pnand %p107, %p108
      %p110 = pneg %p109
      // Predicated region
      $region9: #{moco_forward.4} parent=5 // pred_check
        _
      $region10: #{moco_forward.4} parent=5 // pred_check_branch
        %112 = sbr.rel (%p109) target = $region12
      $region11: #{moco_forward.4} parent=5 // pred_region
        %s113 = ssub.s32 %s10, 1
        // Predicated region
        $region13: #{moco_forward.4} parent=11 // pred_check
          %p114 = pneg %p31
        $region14: #{moco_forward.4} parent=11 // pred_check_branch
          %116 = sbr.rel (%p114) target = $region16
        $region15: #{moco_forward.4} parent=11 // pred_region
          _
        $region16: #{moco_forward.4} parent=11 // pred_fallthru
          _
        // Predicated region
        $region17: #{moco_forward.4} parent=11 // pred_check
          %p117 = pneg %p52
        $region18: #{moco_forward.4} parent=11 // pred_check_branch
          %119 = sbr.rel (%p117) target = $region20
        $region19: #{moco_forward.4} parent=11 // pred_region
          _
        $region20: #{moco_forward.4} parent=11 // pred_fallthru
          _
      $region12: #{moco_forward.4} parent=5 // pred_fallthru
        _
      %p120 = scmp.lt.s32.totalorder %s10, 2
      // Predicated region
      $region21: #{moco_forward.4} parent=5 // pred_check
        %p121 = pneg %p120
      $region22: #{moco_forward.4} parent=5 // pred_check_branch
        %123 = sbr.rel (%p121) target = $region24
      $region23: #{moco_forward.4} parent=5 // pred_region
        // Predicated region
        $region25: #{moco_forward.4} parent=23 // pred_check
          %p124 = pneg %p72
        $region26: #{moco_forward.4} parent=23 // pred_check_branch
          %126 = sbr.rel (%p124) target = $region28
        $region27: #{moco_forward.4} parent=23 // pred_region
          %s127 = smul.u32 32, %s10
          %p128 = scmp.lt.s32.totalorder %s127, 63
          %s129 = scalar_select %p128, %s127, 63
          %s130 = smul.addr %s129, 8
          %s131 = scalar_lea.vmem %s2, %s130
          %s132 = smul.u32 32, %s10
        $region28: #{moco_forward.4} parent=23 // pred_fallthru
          _
      $region24: #{moco_forward.4} parent=5 // pred_fallthru
        _
      %p133 = scmp.le.s32.totalorder 1, %s10
      %p134 = scmp.lt.s32.totalorder %s10, 3
      %p135 = pnand %p133, %p134
      %p136 = pneg %p135
      // Predicated region
      $region29: #{moco_forward.4} parent=5 // pred_check
        _
      $region30: #{moco_forward.4} parent=5 // pred_check_branch
        %138 = sbr.rel (%p135) target = $region32
      $region31: #{moco_forward.4} parent=5 // pred_region
        %s139 = ssub.s32 %s10, 1
        %p140 = pneg %p31
        %p141 = pneg %p28
        %p142 = pneg %p52
        %p143 = pneg %p49
        %s144 = smul.u32 32, %s15
        %p145 = scmp.lt.s32.totalorder %s144, 63
        %s146 = scalar_select %p145, %s144, 63
        %s147 = smul.addr %s146, 8
        %s148 = scalar_lea.vmem %s2, %s147
        %p149 = pneg %p78
        %p150 = pneg %p75
        %p151 = pneg %p99
        %p152 = pneg %p96
        %s153 = smul.u32 32, %s15
        %p154 = scmp.lt.s32.totalorder %s153, 63
        %s155 = scalar_select %p154, %s153, 63
        %s156 = smul.addr %s155, 8
        %s157 = scalar_lea.vmem %s2, %s156
        %s158 = smul.u32 32, %s15
        %p160 = scmp.eq.s32.totalorder %s15, 0
        // Predicated region
        $region33: #{moco_forward.4} parent=31 // pred_check
          %p161 = pneg %p160
        $region34: #{moco_forward.4} parent=31 // pred_check_branch
          %163 = sbr.rel (%p161) target = $region36
        $region35: #{moco_forward.4} parent=31 // pred_region
          %v164 = vld [vmem:[%s0] sm:$0xff]
          %v165 = vld [vmem:[%s1] sm:$0xff]
          %v166 = vmul.f32 %v164, %v165
          %167 = vadd.xlane.f32.xlu0 %v166
          %v168 = vpop.xlane.xlu0 %167
          %v169 = vmul.f32 %v168, 14.285714
          %vm170 = vcmask 7168
          %171 = vst.msk [vmem:[#allocation4] sm:$0xff] %vm170, %v169
          %172 = vst.msk [vmem:[#allocation2] sm:$0xff] %vm170, %v169
          %173 = vst.msk [vmem:[#allocation3] sm:$0xff] %vm170, 1.0
        $region36: #{moco_forward.4} parent=31 // pred_fallthru
          _
        %v174 = vld [vmem:[%s0] sm:$0xff]
        %v175 = vpack.c.bf16 %v174, %v174
        %v176 = vld [vmem:[%s157] sm:$0xff]
        %v177 = vld [vmem:[%s157 + $0x8] sm:$0xff]
        %v178 = vld [vmem:[%s157 + $0x10] sm:$0xff]
        %v179 = vld [vmem:[%s157 + $0x18] sm:$0xff]
        %v180 = vld [vmem:[%s157 + $0x20] sm:$0xff]
        %v181 = vld [vmem:[%s157 + $0x28] sm:$0xff]
        %v182 = vld [vmem:[%s157 + $0x30] sm:$0xff]
        %v183 = vld [vmem:[%s157 + $0x38] sm:$0xff]
        %v184 = vld [vmem:[%s157 + $0x40] sm:$0xff]
        %v185 = vld [vmem:[%s157 + $0x48] sm:$0xff]
        %v186 = vld [vmem:[%s157 + $0x50] sm:$0xff]
        %v187 = vld [vmem:[%s157 + $0x58] sm:$0xff]
        %v188 = vld [vmem:[%s157 + $0x60] sm:$0xff]
        %v189 = vld [vmem:[%s157 + $0x68] sm:$0xff]
        %v190 = vld [vmem:[%s157 + $0x70] sm:$0xff]
        %v191 = vld [vmem:[%s157 + $0x78] sm:$0xff]
        %v192 = vld [vmem:[%s157 + $0x80] sm:$0xff]
        %v193 = vld [vmem:[%s157 + $0x88] sm:$0xff]
        %v194 = vld [vmem:[%s157 + $0x90] sm:$0xff]
        %v195 = vld [vmem:[%s157 + $0x98] sm:$0xff]
        %v196 = vld [vmem:[%s157 + $0xa0] sm:$0xff]
        %v197 = vld [vmem:[%s157 + $0xa8] sm:$0xff]
        %v198 = vld [vmem:[%s157 + $0xb0] sm:$0xff]
        %v199 = vld [vmem:[%s157 + $0xb8] sm:$0xff]
        %v200 = vld [vmem:[%s157 + $0xc0] sm:$0xff]
        %v201 = vld [vmem:[%s157 + $0xc8] sm:$0xff]
        %v202 = vld [vmem:[%s157 + $0xd0] sm:$0xff]
        %v203 = vld [vmem:[%s157 + $0xd8] sm:$0xff]
        %v204 = vld [vmem:[%s157 + $0xe0] sm:$0xff]
        %v205 = vld [vmem:[%s157 + $0xe8] sm:$0xff]
        %v206 = vld [vmem:[%s157 + $0xf0] sm:$0xff]
        %v207 = vld [vmem:[%s157 + $0xf8] sm:$0xff]
        %v208 = vpack.c.bf16 %v177, %v176
        %v209 = vpack.c.bf16 %v179, %v178
        %v210 = vpack.c.bf16 %v181, %v180
        %v211 = vpack.c.bf16 %v183, %v182
        %v212 = vpack.c.bf16 %v185, %v184
        %v213 = vpack.c.bf16 %v187, %v186
        %v214 = vpack.c.bf16 %v189, %v188
        %v215 = vpack.c.bf16 %v191, %v190
        %v216 = vpack.c.bf16 %v193, %v192
        %v217 = vpack.c.bf16 %v195, %v194
        %v218 = vpack.c.bf16 %v197, %v196
        %v219 = vpack.c.bf16 %v199, %v198
        %v220 = vpack.c.bf16 %v201, %v200
        %v221 = vpack.c.bf16 %v203, %v202
        %v222 = vpack.c.bf16 %v205, %v204
        %v223 = vpack.c.bf16 %v207, %v206
        %224 = vmatprep.subr.bf16.mxu0 0
        %225 = vmatpush1.bf16.xpose.msra.mxu0 %v208
        %226 = vmatprep.subr.bf16.mxu0 0
        %227 = vmatpush1.bf16.xpose.msra.mxu0 %v209
        %228 = vmatprep.subr.bf16.mxu0 0
        %229 = vmatpush1.bf16.xpose.msra.mxu0 %v210
        %230 = vmatprep.subr.bf16.mxu0 0
        %231 = vmatpush1.bf16.xpose.msra.mxu0 %v211
        %232 = vmatprep.subr.bf16.mxu0 0
        %233 = vmatpush1.bf16.xpose.msra.mxu0 %v212
        %234 = vmatprep.subr.bf16.mxu0 0
        %235 = vmatpush1.bf16.xpose.msra.mxu0 %v213
        %236 = vmatprep.subr.bf16.mxu0 0
        %237 = vmatpush1.bf16.xpose.msra.mxu0 %v214
        %238 = vmatprep.subr.bf16.mxu0 0
        %239 = vmatpush1.bf16.xpose.msra.mxu0 %v215
        %240 = vmatprep.subr.bf16.mxu0 0
        %241 = vmatpush1.bf16.xpose.msra.mxu0 %v216
        %242 = vmatprep.subr.bf16.mxu0 0
        %243 = vmatpush1.bf16.xpose.msra.mxu0 %v217
        %244 = vmatprep.subr.bf16.mxu0 0
        %245 = vmatpush1.bf16.xpose.msra.mxu0 %v218
        %246 = vmatprep.subr.bf16.mxu0 0
        %247 = vmatpush1.bf16.xpose.msra.mxu0 %v219
        %248 = vmatprep.subr.bf16.mxu0 0
        %249 = vmatpush1.bf16.xpose.msra.mxu0 %v220
        %250 = vmatprep.subr.bf16.mxu0 0
        %251 = vmatpush1.bf16.xpose.msra.mxu0 %v221
        %252 = vmatprep.subr.bf16.mxu0 0
        %253 = vmatpush1.bf16.xpose.msra.mxu0 %v222
        %254 = vmatprep.subr.bf16.mxu0 0
        %255 = vmatpush1.bf16.xpose.msra.mxu0 %v223
        %256 = vmatprep.mubr.bf16.mxu0 0
        %257 = vmatmul.mubr.bf16.gmra.mrb[0].mxu0 %v175
        %v258 = vpop.f32.mrb[0].mxu0
        %v259 = vadd.f32 0.0, %v258
        %v260 = vpop.f32.mrb[0].mxu0
        %v261 = vadd.f32 0.0, %v260
        %v262 = vpop.f32.mrb[0].mxu0
        %v263 = vpop.f32.mrb[0].mxu0
        %264 = vdwg.mxu0
        %v265 = vmul.f32 %v259, 14.285714
        %v266 = vmul.f32 %v261, 14.285714
        %v267 = vld [vmem:[#allocation2] sm:$0xff]
        %v268 = vmax.f32 %v265, %v266
        %269 = vmax.xlane.f32.xlu0 %v268
        %v270 = vpop.xlane.xlu0 %269
        %v271 = vmax.f32 %v267, %v270
        %v272 = vld [vmem:[#allocation3] sm:$0xff]
        %v273 = vsub.f32 %v267, %v271
        %v274 = vmul.f32 %v273, 1.442695
        %v275 = vpow.pop %v274
        %v276 = vmul.f32 %v272, %v275
        %278 = vset.pattern.permute.xlu0 0
        %279 = vperm.xlu0 %278, %v271
        %v280 = vpop.permute.xlu0 %279
        %v282 = vsub.f32 %v265, %v280
        %v283 = vsub.f32 %v266, %v280
        %v284 = vmul.f32 %v282, 1.442695
        %v285 = vpow.pop %v284
        %v286 = vmul.f32 %v283, 1.442695
        %v287 = vpow.pop %v286
        %v288 = vadd.f32 %v285, %v287
        %289 = vadd.xlane.f32.xlu0 %v288
        %v290 = vpop.xlane.xlu0 %289
        %v291 = vadd.f32 %v276, %v290
        %vm292 = vcmask 7168
        %293 = vst.msk [vmem:[#allocation3] sm:$0xff] %vm292, %v291
        %294 = vst.msk [vmem:[#allocation2] sm:$0xff] %vm292, %v271
        %p295 = scmp.eq.s32.totalorder %s15, 1
        // Predicated region
        $region37: #{moco_forward.4} parent=31 // pred_check
          %p296 = pneg %p295
        $region38: #{moco_forward.4} parent=31 // pred_check_branch
          %298 = sbr.rel (%p296) target = $region40
        $region39: #{moco_forward.4} parent=31 // pred_region
          %v299 = vld [vmem:[#allocation2] sm:$0xff]
          %v300 = vld [vmem:[#allocation3] sm:$0xff]
          %v301 = vlog2.pop %v300
          %v302 = vmul.f32 %v301, 0.6931472
          %v303 = vadd.f32 %v299, %v302
          %v304 = vld [vmem:[#allocation4] sm:$0xff]
          %v305 = vsub.f32 %v303, %v304
          %v306 = vsel %vm292, %v305, 0.0
          %307 = vadd.xlane.f32.xlu0 %v306
          %v308 = vpop.xlane.xlu0 %307
          %v309 = vrot.slane %v308, 4
          %v310 = vadd.f32 %v308, %v309
          %v311 = vrot.slane %v310, 2
          %v312 = vadd.f32 %v310, %v311
          %v313 = vrot.slane %v312, 1
          %v314 = vadd.f32 %v312, %v313
          %s315 = vtos %v314
          %v316 = vstv %s315
          %v317 = vrcp.pop 8.0
          %v318 = vmul.f32 %v316, %v317
          %vm319 = vcmask 0
          %320 = vst.msk [vmem:[#allocation5] sm:$0x1] %vm319, %v318
        $region40: #{moco_forward.4} parent=31 // pred_fallthru
          _
        // Predicated region
        $region41: #{moco_forward.4} parent=31 // pred_check
          %p321 = pneg %p96
        $region42: #{moco_forward.4} parent=31 // pred_check_branch
          %323 = sbr.rel (%p321) target = $region44
        $region43: #{moco_forward.4} parent=31 // pred_region
          %s325 = ssub.s32 16, 16
          %326 = vsyncadd [#allocation6], %s325
          %s328 = sshll.u32 [#allocation5], 4
          %s329 = int_to_ptr.vmem [resolvable:$true] %s328
          %331 = dma.vmem_to_hbm [thread:$0]  %s329, 16, %s3, [#allocation6]
        $region44: #{moco_forward.4} parent=31 // pred_fallthru
          _
        // Predicated region
        $region45: #{moco_forward.4} parent=31 // pred_check
          %p332 = pneg %p96
        $region46: #{moco_forward.4} parent=31 // pred_check_branch
          %334 = sbr.rel (%p332) target = $region48
        $region47: #{moco_forward.4} parent=31 // pred_region
          %335 = dma.done [#allocation6], 16
        $region48: #{moco_forward.4} parent=31 // pred_fallthru
          _
      $region32: #{moco_forward.4} parent=5 // pred_fallthru
        _
      %p336 = scmp.le.s32.totalorder 2, %s10
      // Predicated region
      $region49: #{moco_forward.4} parent=5 // pred_check
        %p337 = pneg %p336
      $region50: #{moco_forward.4} parent=5 // pred_check_branch
        %339 = sbr.rel (%p337) target = $region52
      $region51: #{moco_forward.4} parent=5 // pred_region
        %s340 = ssub.s32 %s10, 2
      $region52: #{moco_forward.4} parent=5 // pred_fallthru
        _
    $region6: #{moco_forward.4} parent=1 // loop_footer
      %s14 = sadd.s32 1, %s10
    $region7: #{moco_forward.4} parent=1 // loop_footer_branch
      %9 = sbr.rel target = $region3
    $region8: #{moco_forward.4} parent=1 // loop_exit
      _
    %341 = vsyncpa [#allocation6], 1
    %s342 = scalar_lea.sflag [#allocation6], 1
    %343 = vsyncpa %s342, 1

// kernel: moco_forward.5
$region0: #{moco_forward.5}
  #allocation0 [shape = 'u32[]', space=smem, size = 0x4, offset = 0x4, fixed_abs, tag = 'smem constant byte address 0x4 - core index']
  #allocation1 [shape = 'u32[144,128]{1,0:T(1,128)}', space=vmem, size = 0x12000, scoped, tag = 'internal scratch']
  %s0 = inlined_call_operand.vmem [shape: f32[8,128], index: 0, kind: input, shape index: {}]
  %s1 = inlined_call_operand.vmem [shape: f32[512,128], index: 1, kind: input, shape index: {}, may-alias: {1,2}]
  %s2 = inlined_call_operand.vmem [shape: f32[512,128], index: 2, kind: output, shape index: {}, may-alias: {1,2}]
  %s3 = sld [smem:[#allocation0]]
  $region18: #{moco_forward.5} parent=0
    _
  %s5 = ssub.s32 1, %s3
  %s6 = scalar_select 0, %s5, %s3
  // Predicated region
  $region2: #{moco_forward.5} parent=0 // pred_check
    _
  $region3: #{moco_forward.5} parent=0 // pred_check_branch
    %8 = sbr.rel (0) target = $region5
  $region4: #{moco_forward.5} parent=0 // pred_region
    _
  $region5: #{moco_forward.5} parent=0 // pred_fallthru
    _
  // Predicated region
  $region6: #{moco_forward.5} parent=0 // pred_check
    _
  $region7: #{moco_forward.5} parent=0 // pred_check_branch
    %10 = sbr.rel (0) target = $region9
  $region8: #{moco_forward.5} parent=0 // pred_region
    _
  $region9: #{moco_forward.5} parent=0 // pred_fallthru
    _
  %v11 = vld [vmem:[%s0] sm:$0xff]
  %12 = vst [vmem:[%s2] sm:$0xff] %v11
  // Predicated region
  $region10: #{moco_forward.5} parent=0 // pred_check
    _
  $region11: #{moco_forward.5} parent=0 // pred_check_branch
    %14 = sbr.rel (0) target = $region13
  $region12: #{moco_forward.5} parent=0 // pred_region
    _
  $region13: #{moco_forward.5} parent=0 // pred_fallthru
    _
  // Predicated region
  $region14: #{moco_forward.5} parent=0 // pred_check
    _
  $region15: #{moco_forward.5} parent=0 // pred_check_branch
    %16 = sbr.rel (0) target = $region17
  $region16: #{moco_forward.5} parent=0 // pred_region
    _
  $region17: #{moco_forward.5} parent=0 // pred_fallthru
    _

// kernel: moco_forward.3
$region0: #{moco_forward.3}
  #allocation0 [shape = 'u32[]', space=smem, size = 0x4, offset = 0x4, fixed_abs, tag = 'smem constant byte address 0x4 - core index']
  #allocation1 [shape = 'u32[144,128]{1,0:T(1,128)}', space=vmem, size = 0x12000, scoped, tag = 'internal scratch']
  %s0 = inlined_call_operand.vmem [shape: f32[2,8,1024], index: 0, kind: input, shape index: {}]
  %s1 = inlined_call_operand.vmem [shape: f32[2,1024,256], index: 1, kind: input, shape index: {}]
  %s2 = inlined_call_operand.vmem [shape: f32[2,1,256], index: 2, kind: input, shape index: {}]
  %s3 = inlined_call_operand.vmem [shape: f32[2,256,256], index: 3, kind: input, shape index: {}]
  %s4 = inlined_call_operand.vmem [shape: f32[2,1,256], index: 4, kind: input, shape index: {}]
  %s5 = inlined_call_operand.vmem [shape: f32[2,1,256], index: 5, kind: input, shape index: {}]
  %s6 = inlined_call_operand.vmem [shape: f32[2,256,128], index: 6, kind: input, shape index: {}]
  %s7 = inlined_call_operand.vmem [shape: f32[2,8,256], index: 7, kind: output, shape index: {0}]
  %s8 = inlined_call_operand.vmem [shape: f32[2,8,128], index: 8, kind: output, shape index: {1}]
  %9 = xla_tuple %s7, %s8
  %s10 = sld [smem:[#allocation0]]
  $region69: #{moco_forward.3} parent=0
    _
  %s12 = ssub.s32 1, %s10
  %s13 = scalar_select 0, %s12, %s10
  loop: start=0, step=1, limit=4
  $region2: #{moco_forward.3} parent=0 // loop_pre_header
    _
  $region3: #{moco_forward.3} parent=0 // loop_header
    %s15 = sphi 0, %s19
    %p16 = scmp.ge.s32.totalorder %s15, 4
    %s25 = sphi 0, %s27
    %s28 = sphi 0, %s25
    %s29 = sphi 0, %s28
    %s45 = sphi 0, %s29
    %s51 = sphi 0, %s53
    %s54 = sphi 0, %s51
    %s55 = sphi 0, %s54
    %s71 = sphi 0, %s55
    %s77 = sphi 0, %s79
    %s80 = sphi 0, %s77
    %s81 = sphi 0, %s80
    %s97 = sphi 0, %s81
    %s103 = sphi 0, %s105
    %s106 = sphi 0, %s103
    %s107 = sphi 0, %s106
    %s123 = sphi 0, %s107
    %s129 = sphi 0, %s131
    %s132 = sphi 0, %s129
    %s133 = sphi 0, %s132
    %s149 = sphi 0, %s133
    %s155 = sphi 0, %s157
    %s158 = sphi 0, %s155
    %s159 = sphi 0, %s158
    %s175 = sphi 0, %s159
    %s181 = sphi 0, %s183
    %s184 = sphi 0, %s181
    %s185 = sphi 0, %s184
    %s201 = sphi 0, %s185
    %s207 = sphi 0, %s209
    %s210 = sphi 0, %s207
    %s211 = sphi 0, %s210
    %s227 = sphi 0, %s211
    %s233 = sphi 0, %s235
    %s236 = sphi 0, %s233
    %s237 = sphi 0, %s236
    %s253 = sphi 0, %s237
  $region4: #{moco_forward.3} parent=0 // loop_header_branch
    %18 = sbr.rel (%p16) target = $region8
  $region5: #{moco_forward.3} parent=0 // loop_body
    %s20 = ssub.s32 %s15, 1
    %s21 = ssub.s32 %s15, 2
    %s22 = sadd.s32 %s15, 1
    %s23 = ssub.s32 %s15, %s22
    %p24 = scmp.eq.s32.totalorder %s23, 0
    %s26 = sadd.s32 %s25, 1
    %s27 = scalar_select %p24, %s25, %s26
    %p30 = pneg %p24
    %p31 = scmp.eq.s32.totalorder %s15, 1
    %p32 = por %p30, %p31
    %p33 = scmp.ne.s32.totalorder %s25, %s28
    %p34 = scmp.eq.s32.totalorder %s15, 0
    %p35 = por %p33, %p34
    %p36 = scmp.ne.s32.totalorder %s25, %s28
    %p37 = scmp.eq.s32.totalorder %s20, 1
    %p38 = por %p36, %p37
    %p39 = scmp.ne.s32.totalorder %s28, %s29
    %p40 = scmp.eq.s32.totalorder %s20, 0
    %p41 = por %p39, %p40
    %p42 = scmp.ne.s32.totalorder %s28, %s29
    %p43 = scmp.eq.s32.totalorder %s21, 1
    %p44 = por %p42, %p43
    %p46 = scmp.ne.s32.totalorder %s29, %s45
    %p47 = scmp.eq.s32.totalorder %s21, 0
    %p48 = por %p46, %p47
    %s49 = ssub.s32 %s15, %s22
    %p50 = scmp.eq.s32.totalorder %s49, 0
    %s52 = sadd.s32 %s51, 1
    %s53 = scalar_select %p50, %s51, %s52
    %p56 = pneg %p50
    %p57 = scmp.eq.s32.totalorder %s15, 1
    %p58 = por %p56, %p57
    %p59 = scmp.ne.s32.totalorder %s51, %s54
    %p60 = scmp.eq.s32.totalorder %s15, 0
    %p61 = por %p59, %p60
    %p62 = scmp.ne.s32.totalorder %s51, %s54
    %p63 = scmp.eq.s32.totalorder %s20, 1
    %p64 = por %p62, %p63
    %p65 = scmp.ne.s32.totalorder %s54, %s55
    %p66 = scmp.eq.s32.totalorder %s20, 0
    %p67 = por %p65, %p66
    %p68 = scmp.ne.s32.totalorder %s54, %s55
    %p69 = scmp.eq.s32.totalorder %s21, 1
    %p70 = por %p68, %p69
    %p72 = scmp.ne.s32.totalorder %s55, %s71
    %p73 = scmp.eq.s32.totalorder %s21, 0
    %p74 = por %p72, %p73
    %s75 = ssub.s32 %s15, %s22
    %p76 = scmp.eq.s32.totalorder %s75, 0
    %s78 = sadd.s32 %s77, 1
    %s79 = scalar_select %p76, %s77, %s78
    %p82 = pneg %p76
    %p83 = scmp.eq.s32.totalorder %s15, 1
    %p84 = por %p82, %p83
    %p85 = scmp.ne.s32.totalorder %s77, %s80
    %p86 = scmp.eq.s32.totalorder %s15, 0
    %p87 = por %p85, %p86
    %p88 = scmp.ne.s32.totalorder %s77, %s80
    %p89 = scmp.eq.s32.totalorder %s20, 1
    %p90 = por %p88, %p89
    %p91 = scmp.ne.s32.totalorder %s80, %s81
    %p92 = scmp.eq.s32.totalorder %s20, 0
    %p93 = por %p91, %p92
    %p94 = scmp.ne.s32.totalorder %s80, %s81
    %p95 = scmp.eq.s32.totalorder %s21, 1
    %p96 = por %p94, %p95
    %p98 = scmp.ne.s32.totalorder %s81, %s97
    %p99 = scmp.eq.s32.totalorder %s21, 0
    %p100 = por %p98, %p99
    %s101 = ssub.s32 %s15, %s22
    %p102 = scmp.eq.s32.totalorder %s101, 0
    %s104 = sadd.s32 %s103, 1
    %s105 = scalar_select %p102, %s103, %s104
    %p108 = pneg %p102
    %p109 = scmp.eq.s32.totalorder %s15, 1
    %p110 = por %p108, %p109
    %p111 = scmp.ne.s32.totalorder %s103, %s106
    %p112 = scmp.eq.s32.totalorder %s15, 0
    %p113 = por %p111, %p112
    %p114 = scmp.ne.s32.totalorder %s103, %s106
    %p115 = scmp.eq.s32.totalorder %s20, 1
    %p116 = por %p114, %p115
    %p117 = scmp.ne.s32.totalorder %s106, %s107
    %p118 = scmp.eq.s32.totalorder %s20, 0
    %p119 = por %p117, %p118
    %p120 = scmp.ne.s32.totalorder %s106, %s107
    %p121 = scmp.eq.s32.totalorder %s21, 1
    %p122 = por %p120, %p121
    %p124 = scmp.ne.s32.totalorder %s107, %s123
    %p125 = scmp.eq.s32.totalorder %s21, 0
    %p126 = por %p124, %p125
    %s127 = ssub.s32 %s15, %s22
    %p128 = scmp.eq.s32.totalorder %s127, 0
    %s130 = sadd.s32 %s129, 1
    %s131 = scalar_select %p128, %s129, %s130
    %p134 = pneg %p128
    %p135 = scmp.eq.s32.totalorder %s15, 1
    %p136 = por %p134, %p135
    %p137 = scmp.ne.s32.totalorder %s129, %s132
    %p138 = scmp.eq.s32.totalorder %s15, 0
    %p139 = por %p137, %p138
    %p140 = scmp.ne.s32.totalorder %s129, %s132
    %p141 = scmp.eq.s32.totalorder %s20, 1
    %p142 = por %p140, %p141
    %p143 = scmp.ne.s32.totalorder %s132, %s133
    %p144 = scmp.eq.s32.totalorder %s20, 0
    %p145 = por %p143, %p144
    %p146 = scmp.ne.s32.totalorder %s132, %s133
    %p147 = scmp.eq.s32.totalorder %s21, 1
    %p148 = por %p146, %p147
    %p150 = scmp.ne.s32.totalorder %s133, %s149
    %p151 = scmp.eq.s32.totalorder %s21, 0
    %p152 = por %p150, %p151
    %s153 = ssub.s32 %s15, %s22
    %p154 = scmp.eq.s32.totalorder %s153, 0
    %s156 = sadd.s32 %s155, 1
    %s157 = scalar_select %p154, %s155, %s156
    %p160 = pneg %p154
    %p161 = scmp.eq.s32.totalorder %s15, 1
    %p162 = por %p160, %p161
    %p163 = scmp.ne.s32.totalorder %s155, %s158
    %p164 = scmp.eq.s32.totalorder %s15, 0
    %p165 = por %p163, %p164
    %p166 = scmp.ne.s32.totalorder %s155, %s158
    %p167 = scmp.eq.s32.totalorder %s20, 1
    %p168 = por %p166, %p167
    %p169 = scmp.ne.s32.totalorder %s158, %s159
    %p170 = scmp.eq.s32.totalorder %s20, 0
    %p171 = por %p169, %p170
    %p172 = scmp.ne.s32.totalorder %s158, %s159
    %p173 = scmp.eq.s32.totalorder %s21, 1
    %p174 = por %p172, %p173
    %p176 = scmp.ne.s32.totalorder %s159, %s175
    %p177 = scmp.eq.s32.totalorder %s21, 0
    %p178 = por %p176, %p177
    %s179 = ssub.s32 %s15, %s22
    %p180 = scmp.eq.s32.totalorder %s179, 0
    %s182 = sadd.s32 %s181, 1
    %s183 = scalar_select %p180, %s181, %s182
    %p186 = pneg %p180
    %p187 = scmp.eq.s32.totalorder %s15, 1
    %p188 = por %p186, %p187
    %p189 = scmp.ne.s32.totalorder %s181, %s184
    %p190 = scmp.eq.s32.totalorder %s15, 0
    %p191 = por %p189, %p190
    %p192 = scmp.ne.s32.totalorder %s181, %s184
    %p193 = scmp.eq.s32.totalorder %s20, 1
    %p194 = por %p192, %p193
    %p195 = scmp.ne.s32.totalorder %s184, %s185
    %p196 = scmp.eq.s32.totalorder %s20, 0
    %p197 = por %p195, %p196
    %p198 = scmp.ne.s32.totalorder %s184, %s185
    %p199 = scmp.eq.s32.totalorder %s21, 1
    %p200 = por %p198, %p199
    %p202 = scmp.ne.s32.totalorder %s185, %s201
    %p203 = scmp.eq.s32.totalorder %s21, 0
    %p204 = por %p202, %p203
    %s205 = ssub.s32 %s15, %s22
    %p206 = scmp.eq.s32.totalorder %s205, 0
    %s208 = sadd.s32 %s207, 1
    %s209 = scalar_select %p206, %s207, %s208
    %p212 = pneg %p206
    %p213 = scmp.eq.s32.totalorder %s15, 1
    %p214 = por %p212, %p213
    %p215 = scmp.ne.s32.totalorder %s207, %s210
    %p216 = scmp.eq.s32.totalorder %s15, 0
    %p217 = por %p215, %p216
    %p218 = scmp.ne.s32.totalorder %s207, %s210
    %p219 = scmp.eq.s32.totalorder %s20, 1
    %p220 = por %p218, %p219
    %p221 = scmp.ne.s32.totalorder %s210, %s211
    %p222 = scmp.eq.s32.totalorder %s20, 0
    %p223 = por %p221, %p222
    %p224 = scmp.ne.s32.totalorder %s210, %s211
    %p225 = scmp.eq.s32.totalorder %s21, 1
    %p226 = por %p224, %p225
    %p228 = scmp.ne.s32.totalorder %s211, %s227
    %p229 = scmp.eq.s32.totalorder %s21, 0
    %p230 = por %p228, %p229
    %s231 = ssub.s32 %s15, %s22
    %p232 = scmp.eq.s32.totalorder %s231, 0
    %s234 = sadd.s32 %s233, 1
    %s235 = scalar_select %p232, %s233, %s234
    %p238 = pneg %p232
    %p239 = scmp.eq.s32.totalorder %s15, 1
    %p240 = por %p238, %p239
    %p241 = scmp.ne.s32.totalorder %s233, %s236
    %p242 = scmp.eq.s32.totalorder %s15, 0
    %p243 = por %p241, %p242
    %p244 = scmp.ne.s32.totalorder %s233, %s236
    %p245 = scmp.eq.s32.totalorder %s20, 1
    %p246 = por %p244, %p245
    %p247 = scmp.ne.s32.totalorder %s236, %s237
    %p248 = scmp.eq.s32.totalorder %s20, 0
    %p249 = por %p247, %p248
    %p250 = scmp.ne.s32.totalorder %s236, %s237
    %p251 = scmp.eq.s32.totalorder %s21, 1
    %p252 = por %p250, %p251
    %p254 = scmp.ne.s32.totalorder %s237, %s253
    %p255 = scmp.eq.s32.totalorder %s21, 0
    %p256 = por %p254, %p255
    %p257 = scmp.le.s32.totalorder 1, %s15
    %p258 = scmp.lt.s32.totalorder %s15, 3
    %p259 = pnand %p257, %p258
    %p260 = pneg %p259
    // Predicated region
    $region9: #{moco_forward.3} parent=5 // pred_check
      _
    $region10: #{moco_forward.3} parent=5 // pred_check_branch
      %262 = sbr.rel (%p259) target = $region12
    $region11: #{moco_forward.3} parent=5 // pred_region
      %s263 = ssub.s32 %s15, 1
    $region12: #{moco_forward.3} parent=5 // pred_fallthru
      _
    %p264 = scmp.lt.s32.totalorder %s15, 2
    // Predicated region
    $region13: #{moco_forward.3} parent=5 // pred_check
      %p265 = pneg %p264
    $region14: #{moco_forward.3} parent=5 // pred_check_branch
      %267 = sbr.rel (%p265) target = $region16
    $region15: #{moco_forward.3} parent=5 // pred_region
      // Predicated region
      $region17: #{moco_forward.3} parent=15 // pred_check
        %p268 = pneg %p35
      $region18: #{moco_forward.3} parent=15 // pred_check_branch
        %270 = sbr.rel (%p268) target = $region20
      $region19: #{moco_forward.3} parent=15 // pred_region
        %p271 = scmp.lt.s32.totalorder %s15, 1
        %s272 = scalar_select %p271, %s15, 1
        %s273 = smul.addr %s272, 8
        %s274 = smul.addr %s273, 8
        %s275 = scalar_lea.vmem %s0, %s274
      $region20: #{moco_forward.3} parent=15 // pred_fallthru
        _
      // Predicated region
      $region21: #{moco_forward.3} parent=15 // pred_check
        %p276 = pneg %p61
      $region22: #{moco_forward.3} parent=15 // pred_check_branch
        %278 = sbr.rel (%p276) target = $region24
      $region23: #{moco_forward.3} parent=15 // pred_region
        %p279 = scmp.lt.s32.totalorder %s15, 1
        %s280 = scalar_select %p279, %s15, 1
        %s281 = smul.addr %s280, 256
        %s282 = smul.addr %s281, 8
        %s283 = scalar_lea.vmem %s1, %s282
      $region24: #{moco_forward.3} parent=15 // pred_fallthru
        _
      // Predicated region
      $region25: #{moco_forward.3} parent=15 // pred_check
        %p284 = pneg %p87
      $region26: #{moco_forward.3} parent=15 // pred_check_branch
        %286 = sbr.rel (%p284) target = $region28
      $region27: #{moco_forward.3} parent=15 // pred_region
        %p287 = scmp.lt.s32.totalorder %s15, 1
        %s288 = scalar_select %p287, %s15, 1
        %s289 = smul.addr %s288, 2
        %s290 = scalar_lea.vmem %s2, %s289
      $region28: #{moco_forward.3} parent=15 // pred_fallthru
        _
      // Predicated region
      $region29: #{moco_forward.3} parent=15 // pred_check
        %p291 = pneg %p113
      $region30: #{moco_forward.3} parent=15 // pred_check_branch
        %293 = sbr.rel (%p291) target = $region32
      $region31: #{moco_forward.3} parent=15 // pred_region
        %p294 = scmp.lt.s32.totalorder %s15, 1
        %s295 = scalar_select %p294, %s15, 1
        %s296 = smul.addr %s295, 64
        %s297 = smul.addr %s296, 8
        %s298 = scalar_lea.vmem %s3, %s297
      $region32: #{moco_forward.3} parent=15 // pred_fallthru
        _
      // Predicated region
      $region33: #{moco_forward.3} parent=15 // pred_check
        %p299 = pneg %p139
      $region34: #{moco_forward.3} parent=15 // pred_check_branch
        %301 = sbr.rel (%p299) target = $region36
      $region35: #{moco_forward.3} parent=15 // pred_region
        %p302 = scmp.lt.s32.totalorder %s15, 1
        %s303 = scalar_select %p302, %s15, 1
        %s304 = smul.addr %s303, 2
        %s305 = scalar_lea.vmem %s4, %s304
      $region36: #{moco_forward.3} parent=15 // pred_fallthru
        _
      // Predicated region
      $region37: #{moco_forward.3} parent=15 // pred_check
        %p306 = pneg %p165
      $region38: #{moco_forward.3} parent=15 // pred_check_branch
        %308 = sbr.rel (%p306) target = $region40
      $region39: #{moco_forward.3} parent=15 // pred_region
        %p309 = scmp.lt.s32.totalorder %s15, 1
        %s310 = scalar_select %p309, %s15, 1
        %s311 = smul.addr %s310, 2
        %s312 = scalar_lea.vmem %s5, %s311
      $region40: #{moco_forward.3} parent=15 // pred_fallthru
        _
      // Predicated region
      $region41: #{moco_forward.3} parent=15 // pred_check
        %p313 = pneg %p191
      $region42: #{moco_forward.3} parent=15 // pred_check_branch
        %315 = sbr.rel (%p313) target = $region44
      $region43: #{moco_forward.3} parent=15 // pred_region
        %p316 = scmp.lt.s32.totalorder %s15, 1
        %s317 = scalar_select %p316, %s15, 1
        %s318 = smul.addr %s317, 32
        %s319 = smul.addr %s318, 8
        %s320 = scalar_lea.vmem %s6, %s319
      $region44: #{moco_forward.3} parent=15 // pred_fallthru
        _
    $region16: #{moco_forward.3} parent=5 // pred_fallthru
      _
    %p321 = scmp.le.s32.totalorder 1, %s15
    %p322 = scmp.lt.s32.totalorder %s15, 3
    %p323 = pnand %p321, %p322
    %p324 = pneg %p323
    // Predicated region
    $region45: #{moco_forward.3} parent=5 // pred_check
      _
    $region46: #{moco_forward.3} parent=5 // pred_check_branch
      %326 = sbr.rel (%p323) target = $region48
    $region47: #{moco_forward.3} parent=5 // pred_region
      %s327 = ssub.s32 %s15, 1
      %p328 = scmp.lt.s32.totalorder %s20, 1
      %s329 = scalar_select %p328, %s20, 1
      %s330 = smul.addr %s329, 8
      %s331 = smul.addr %s330, 8
      %s332 = scalar_lea.vmem %s0, %s331
      %p333 = pneg %p41
      %p334 = pneg %p38
      %p335 = scmp.lt.s32.totalorder %s20, 1
      %s336 = scalar_select %p335, %s20, 1
      %s337 = smul.addr %s336, 256
      %s338 = smul.addr %s337, 8
      %s339 = scalar_lea.vmem %s1, %s338
      %p340 = pneg %p67
      %p341 = pneg %p64
      %p342 = scmp.lt.s32.totalorder %s20, 1
      %s343 = scalar_select %p342, %s20, 1
      %s344 = smul.addr %s343, 2
      %s345 = scalar_lea.vmem %s2, %s344
      %p346 = pneg %p93
      %p347 = pneg %p90
      %p348 = scmp.lt.s32.totalorder %s20, 1
      %s349 = scalar_select %p348, %s20, 1
      %s350 = smul.addr %s349, 64
      %s351 = smul.addr %s350, 8
      %s352 = scalar_lea.vmem %s3, %s351
      %p353 = pneg %p119
      %p354 = pneg %p116
      %p355 = scmp.lt.s32.totalorder %s20, 1
      %s356 = scalar_select %p355, %s20, 1
      %s357 = smul.addr %s356, 2
      %s358 = scalar_lea.vmem %s4, %s357
      %p359 = pneg %p145
      %p360 = pneg %p142
      %p361 = scmp.lt.s32.totalorder %s20, 1
      %s362 = scalar_select %p361, %s20, 1
      %s363 = smul.addr %s362, 2
      %s364 = scalar_lea.vmem %s5, %s363
      %p365 = pneg %p171
      %p366 = pneg %p168
      %p367 = scmp.lt.s32.totalorder %s20, 1
      %s368 = scalar_select %p367, %s20, 1
      %s369 = smul.addr %s368, 32
      %s370 = smul.addr %s369, 8
      %s371 = scalar_lea.vmem %s6, %s370
      %p372 = pneg %p197
      %p373 = pneg %p194
      %p374 = pneg %p223
      %p375 = pneg %p220
      %p376 = scmp.lt.s32.totalorder %s20, 1
      %s377 = scalar_select %p376, %s20, 1
      %s378 = smul.addr %s377, 2
      %s379 = smul.addr %s378, 8
      %s380 = scalar_lea.vmem %s7, %s379
      %p381 = pneg %p249
      %p382 = pneg %p246
      %p383 = scmp.lt.s32.totalorder %s20, 1
      %s384 = scalar_select %p383, %s20, 1
      %s385 = smul.addr %s384, 8
      %s386 = scalar_lea.vmem %s8, %s385
      %p387 = scmp.lt.s32.totalorder %s20, 1
      %s388 = scalar_select %p387, %s20, 1
      %s389 = smul.addr %s388, 8
      %s390 = smul.addr %s389, 8
      %s391 = scalar_lea.vmem %s0, %s390
      %p392 = scmp.lt.s32.totalorder %s20, 1
      %s393 = scalar_select %p392, %s20, 1
      %s394 = smul.addr %s393, 256
      %s395 = smul.addr %s394, 8
      %s396 = scalar_lea.vmem %s1, %s395
      %p397 = scmp.lt.s32.totalorder %s20, 1
      %s398 = scalar_select %p397, %s20, 1
      %s399 = smul.addr %s398, 2
      %s400 = scalar_lea.vmem %s2, %s399
      %p401 = scmp.lt.s32.totalorder %s20, 1
      %s402 = scalar_select %p401, %s20, 1
      %s403 = smul.addr %s402, 64
      %s404 = smul.addr %s403, 8
      %s405 = scalar_lea.vmem %s3, %s404
      %p406 = scmp.lt.s32.totalorder %s20, 1
      %s407 = scalar_select %p406, %s20, 1
      %s408 = smul.addr %s407, 2
      %s409 = scalar_lea.vmem %s4, %s408
      %p410 = scmp.lt.s32.totalorder %s20, 1
      %s411 = scalar_select %p410, %s20, 1
      %s412 = smul.addr %s411, 2
      %s413 = scalar_lea.vmem %s5, %s412
      %p414 = scmp.lt.s32.totalorder %s20, 1
      %s415 = scalar_select %p414, %s20, 1
      %s416 = smul.addr %s415, 32
      %s417 = smul.addr %s416, 8
      %s418 = scalar_lea.vmem %s6, %s417
      %p419 = scmp.lt.s32.totalorder %s20, 1
      %s420 = scalar_select %p419, %s20, 1
      %s421 = smul.addr %s420, 2
      %s422 = smul.addr %s421, 8
      %s423 = scalar_lea.vmem %s7, %s422
      %p424 = scmp.lt.s32.totalorder %s20, 1
      %s425 = scalar_select %p424, %s20, 1
      %s426 = smul.addr %s425, 8
      %s427 = scalar_lea.vmem %s8, %s426
      %v429 = vld [vmem:[%s391] sm:$0xff]
      %v430 = vld [vmem:[%s391 + $0x8] sm:$0xff]
      %v431 = vld [vmem:[%s391 + $0x10] sm:$0xff]
      %v432 = vld [vmem:[%s391 + $0x18] sm:$0xff]
      %v433 = vld [vmem:[%s391 + $0x20] sm:$0xff]
      %v434 = vld [vmem:[%s391 + $0x28] sm:$0xff]
      %v435 = vld [vmem:[%s391 + $0x30] sm:$0xff]
      %v436 = vld [vmem:[%s391 + $0x38] sm:$0xff]
      %v437 = vpack.c.bf16 %v429, %v429
      %v438 = vpack.c.bf16 %v430, %v430
      %v439 = vpack.c.bf16 %v431, %v431
      %v440 = vpack.c.bf16 %v432, %v432
      %v441 = vpack.c.bf16 %v433, %v433
      %v442 = vpack.c.bf16 %v434, %v434
      %v443 = vpack.c.bf16 %v435, %v435
      %v444 = vpack.c.bf16 %v436, %v436
      %v445 = vld [vmem:[%s396] sm:$0xff]
      %v446 = vld [vmem:[%s396 + $0x8] sm:$0xff]
      %v447 = vld [vmem:[%s396 + $0x10] sm:$0xff]
      %v448 = vld [vmem:[%s396 + $0x18] sm:$0xff]
      %v449 = vld [vmem:[%s396 + $0x20] sm:$0xff]
      %v450 = vld [vmem:[%s396 + $0x28] sm:$0xff]
      %v451 = vld [vmem:[%s396 + $0x30] sm:$0xff]
      %v452 = vld [vmem:[%s396 + $0x38] sm:$0xff]
      %v453 = vld [vmem:[%s396 + $0x40] sm:$0xff]
      %v454 = vld [vmem:[%s396 + $0x48] sm:$0xff]
      %v455 = vld [vmem:[%s396 + $0x50] sm:$0xff]
      %v456 = vld [vmem:[%s396 + $0x58] sm:$0xff]
      %v457 = vld [vmem:[%s396 + $0x60] sm:$0xff]
      %v458 = vld [vmem:[%s396 + $0x68] sm:$0xff]
      %v459 = vld [vmem:[%s396 + $0x70] sm:$0xff]
      %v460 = vld [vmem:[%s396 + $0x78] sm:$0xff]
      %v461 = vld [vmem:[%s396 + $0x80] sm:$0xff]
      %v462 = vld [vmem:[%s396 + $0x88] sm:$0xff]
      %v463 = vld [vmem:[%s396 + $0x90] sm:$0xff]
      %v464 = vld [vmem:[%s396 + $0x98] sm:$0xff]
      %v465 = vld [vmem:[%s396 + $0xa0] sm:$0xff]
      %v466 = vld [vmem:[%s396 + $0xa8] sm:$0xff]
      %v467 = vld [vmem:[%s396 + $0xb0] sm:$0xff]
      %v468 = vld [vmem:[%s396 + $0xb8] sm:$0xff]
      %v469 = vld [vmem:[%s396 + $0xc0] sm:$0xff]
      %v470 = vld [vmem:[%s396 + $0xc8] sm:$0xff]
      %v471 = vld [vmem:[%s396 + $0xd0] sm:$0xff]
      %v472 = vld [vmem:[%s396 + $0xd8] sm:$0xff]
      %v473 = vld [vmem:[%s396 + $0xe0] sm:$0xff]
      %v474 = vld [vmem:[%s396 + $0xe8] sm:$0xff]
      %v475 = vld [vmem:[%s396 + $0xf0] sm:$0xff]
      %v476 = vld [vmem:[%s396 + $0xf8] sm:$0xff]
      %v477 = vld [vmem:[%s396 + $0x100] sm:$0xff]
      %v478 = vld [vmem:[%s396 + $0x108] sm:$0xff]
      %v479 = vld [vmem:[%s396 + $0x110] sm:$0xff]
      %v480 = vld [vmem:[%s396 + $0x118] sm:$0xff]
      %v481 = vld [vmem:[%s396 + $0x120] sm:$0xff]
      %v482 = vld [vmem:[%s396 + $0x128] sm:$0xff]
      %v483 = vld [vmem:[%s396 + $0x130] sm:$0xff]
      %v484 = vld [vmem:[%s396 + $0x138] sm:$0xff]
      %v485 = vld [vmem:[%s396 + $0x140] sm:$0xff]
      %v486 = vld [vmem:[%s396 + $0x148] sm:$0xff]
      %v487 = vld [vmem:[%s396 + $0x150] sm:$0xff]
      %v488 = vld [vmem:[%s396 + $0x158] sm:$0xff]
      %v489 = vld [vmem:[%s396 + $0x160] sm:$0xff]
      %v490 = vld [vmem:[%s396 + $0x168] sm:$0xff]
      %v491 = vld [vmem:[%s396 + $0x170] sm:$0xff]
      %v492 = vld [vmem:[%s396 + $0x178] sm:$0xff]
      %v493 = vld [vmem:[%s396 + $0x180] sm:$0xff]
      %v494 = vld [vmem:[%s396 + $0x188] sm:$0xff]
      %v495 = vld [vmem:[%s396 + $0x190] sm:$0xff]
      %v496 = vld [vmem:[%s396 + $0x198] sm:$0xff]
      %v497 = vld [vmem:[%s396 + $0x1a0] sm:$0xff]
      %v498 = vld [vmem:[%s396 + $0x1a8] sm:$0xff]
      %v499 = vld [vmem:[%s396 + $0x1b0] sm:$0xff]
      %v500 = vld [vmem:[%s396 + $0x1b8] sm:$0xff]
      %v501 = vld [vmem:[%s396 + $0x1c0] sm:$0xff]
      %v502 = vld [vmem:[%s396 + $0x1c8] sm:$0xff]
      %v503 = vld [vmem:[%s396 + $0x1d0] sm:$0xff]
      %v504 = vld [vmem:[%s396 + $0x1d8] sm:$0xff]
      %v505 = vld [vmem:[%s396 + $0x1e0] sm:$0xff]
      %v506 = vld [vmem:[%s396 + $0x1e8] sm:$0xff]
      %v507 = vld [vmem:[%s396 + $0x1f0] sm:$0xff]
      %v508 = vld [vmem:[%s396 + $0x1f8] sm:$0xff]
      %v509 = vld [vmem:[%s396 + $0x200] sm:$0xff]
      %v510 = vld [vmem:[%s396 + $0x208] sm:$0xff]
      %v511 = vld [vmem:[%s396 + $0x210] sm:$0xff]
      %v512 = vld [vmem:[%s396 + $0x218] sm:$0xff]
      %v513 = vld [vmem:[%s396 + $0x220] sm:$0xff]
      %v514 = vld [vmem:[%s396 + $0x228] sm:$0xff]
      %v515 = vld [vmem:[%s396 + $0x230] sm:$0xff]
      %v516 = vld [vmem:[%s396 + $0x238] sm:$0xff]
      %v517 = vld [vmem:[%s396 + $0x240] sm:$0xff]
      %v518 = vld [vmem:[%s396 + $0x248] sm:$0xff]
      %v519 = vld [vmem:[%s396 + $0x250] sm:$0xff]
      %v520 = vld [vmem:[%s396 + $0x258] sm:$0xff]
      %v521 = vld [vmem:[%s396 + $0x260] sm:$0xff]
      %v522 = vld [vmem:[%s396 + $0x268] sm:$0xff]
      %v523 = vld [vmem:[%s396 + $0x270] sm:$0xff]
      %v524 = vld [vmem:[%s396 + $0x278] sm:$0xff]
      %v525 = vld [vmem:[%s396 + $0x280] sm:$0xff]
      %v526 = vld [vmem:[%s396 + $0x288] sm:$0xff]
      %v527 = vld [vmem:[%s396 + $0x290] sm:$0xff]
      %v528 = vld [vmem:[%s396 + $0x298] sm:$0xff]
      %v529 = vld [vmem:[%s396 + $0x2a0] sm:$0xff]
      %v530 = vld [vmem:[%s396 + $0x2a8] sm:$0xff]
      %v531 = vld [vmem:[%s396 + $0x2b0] sm:$0xff]
      %v532 = vld [vmem:[%s396 + $0x2b8] sm:$0xff]
      %v533 = vld [vmem:[%s396 + $0x2c0] sm:$0xff]
      %v534 = vld [vmem:[%s396 + $0x2c8] sm:$0xff]
      %v535 = vld [vmem:[%s396 + $0x2d0] sm:$0xff]
      %v536 = vld [vmem:[%s396 + $0x2d8] sm:$0xff]
      %v537 = vld [vmem:[%s396 + $0x2e0] sm:$0xff]
      %v538 = vld [vmem:[%s396 + $0x2e8] sm:$0xff]
      %v539 = vld [vmem:[%s396 + $0x2f0] sm:$0xff]
      %v540 = vld [vmem:[%s396 + $0x2f8] sm:$0xff]
      %v541 = vld [vmem:[%s396 + $0x300] sm:$0xff]
      %v542 = vld [vmem:[%s396 + $0x308] sm:$0xff]
      %v543 = vld [vmem:[%s396 + $0x310] sm:$0xff]
      %v544 = vld [vmem:[%s396 + $0x318] sm:$0xff]
      %v545 = vld [vmem:[%s396 + $0x320] sm:$0xff]
      %v546 = vld [vmem:[%s396 + $0x328] sm:$0xff]
      %v547 = vld [vmem:[%s396 + $0x330] sm:$0xff]
      %v548 = vld [vmem:[%s396 + $0x338] sm:$0xff]
      %v549 = vld [vmem:[%s396 + $0x340] sm:$0xff]
      %v550 = vld [vmem:[%s396 + $0x348] sm:$0xff]
      %v551 = vld [vmem:[%s396 + $0x350] sm:$0xff]
      %v552 = vld [vmem:[%s396 + $0x358] sm:$0xff]
      %v553 = vld [vmem:[%s396 + $0x360] sm:$0xff]
      %v554 = vld [vmem:[%s396 + $0x368] sm:$0xff]
      %v555 = vld [vmem:[%s396 + $0x370] sm:$0xff]
      %v556 = vld [vmem:[%s396 + $0x378] sm:$0xff]
      %v557 = vld [vmem:[%s396 + $0x380] sm:$0xff]
      %v558 = vld [vmem:[%s396 + $0x388] sm:$0xff]
      %v559 = vld [vmem:[%s396 + $0x390] sm:$0xff]
      %v560 = vld [vmem:[%s396 + $0x398] sm:$0xff]
      %v561 = vld [vmem:[%s396 + $0x3a0] sm:$0xff]
      %v562 = vld [vmem:[%s396 + $0x3a8] sm:$0xff]
      %v563 = vld [vmem:[%s396 + $0x3b0] sm:$0xff]
      %v564 = vld [vmem:[%s396 + $0x3b8] sm:$0xff]
      %v565 = vld [vmem:[%s396 + $0x3c0] sm:$0xff]
      %v566 = vld [vmem:[%s396 + $0x3c8] sm:$0xff]
      %v567 = vld [vmem:[%s396 + $0x3d0] sm:$0xff]
      %v568 = vld [vmem:[%s396 + $0x3d8] sm:$0xff]
      %v569 = vld [vmem:[%s396 + $0x3e0] sm:$0xff]
      %v570 = vld [vmem:[%s396 + $0x3e8] sm:$0xff]
      %v571 = vld [vmem:[%s396 + $0x3f0] sm:$0xff]
      %v572 = vld [vmem:[%s396 + $0x3f8] sm:$0xff]
      %v573 = vld [vmem:[%s396 + $0x400] sm:$0xff]
      %v574 = vld [vmem:[%s396 + $0x408] sm:$0xff]
      %v575 = vld [vmem:[%s396 + $0x410] sm:$0xff]
      %v576 = vld [vmem:[%s396 + $0x418] sm:$0xff]
      %v577 = vld [vmem:[%s396 + $0x420] sm:$0xff]
      %v578 = vld [vmem:[%s396 + $0x428] sm:$0xff]
      %v579 = vld [vmem:[%s396 + $0x430] sm:$0xff]
      %v580 = vld [vmem:[%s396 + $0x438] sm:$0xff]
      %v581 = vld [vmem:[%s396 + $0x440] sm:$0xff]
      %v582 = vld [vmem:[%s396 + $0x448] sm:$0xff]
      %v583 = vld [vmem:[%s396 + $0x450] sm:$0xff]
      %v584 = vld [vmem:[%s396 + $0x458] sm:$0xff]
      %v585 = vld [vmem:[%s396 + $0x460] sm:$0xff]
      %v586 = vld [vmem:[%s396 + $0x468] sm:$0xff]
      %v587 = vld [vmem:[%s396 + $0x470] sm:$0xff]
      %v588 = vld [vmem:[%s396 + $0x478] sm:$0xff]
      %v589 = vld [vmem:[%s396 + $0x480] sm:$0xff]
      %v590 = vld [vmem:[%s396 + $0x488] sm:$0xff]
      %v591 = vld [vmem:[%s396 + $0x490] sm:$0xff]
      %v592 = vld [vmem:[%s396 + $0x498] sm:$0xff]
      %v593 = vld [vmem:[%s396 + $0x4a0] sm:$0xff]
      %v594 = vld [vmem:[%s396 + $0x4a8] sm:$0xff]
      %v595 = vld [vmem:[%s396 + $0x4b0] sm:$0xff]
      %v596 = vld [vmem:[%s396 + $0x4b8] sm:$0xff]
      %v597 = vld [vmem:[%s396 + $0x4c0] sm:$0xff]
      %v598 = vld [vmem:[%s396 + $0x4c8] sm:$0xff]
      %v599 = vld [vmem:[%s396 + $0x4d0] sm:$0xff]
      %v600 = vld [vmem:[%s396 + $0x4d8] sm:$0xff]
      %v601 = vld [vmem:[%s396 + $0x4e0] sm:$0xff]
      %v602 = vld [vmem:[%s396 + $0x4e8] sm:$0xff]
      %v603 = vld [vmem:[%s396 + $0x4f0] sm:$0xff]
      %v604 = vld [vmem:[%s396 + $0x4f8] sm:$0xff]
      %v605 = vld [vmem:[%s396 + $0x500] sm:$0xff]
      %v606 = vld [vmem:[%s396 + $0x508] sm:$0xff]
      %v607 = vld [vmem:[%s396 + $0x510] sm:$0xff]
      %v608 = vld [vmem:[%s396 + $0x518] sm:$0xff]
      %v609 = vld [vmem:[%s396 + $0x520] sm:$0xff]
      %v610 = vld [vmem:[%s396 + $0x528] sm:$0xff]
      %v611 = vld [vmem:[%s396 + $0x530] sm:$0xff]
      %v612 = vld [vmem:[%s396 + $0x538] sm:$0xff]
      %v613 = vld [vmem:[%s396 + $0x540] sm:$0xff]
      %v614 = vld [vmem:[%s396 + $0x548] sm:$0xff]
      %v615 = vld [vmem:[%s396 + $0x550] sm:$0xff]
      %v616 = vld [vmem:[%s396 + $0x558] sm:$0xff]
      %v617 = vld [vmem:[%s396 + $0x560] sm:$0xff]
      %v618 = vld [vmem:[%s396 + $0x568] sm:$0xff]
      %v619 = vld [vmem:[%s396 + $0x570] sm:$0xff]
      %v620 = vld [vmem:[%s396 + $0x578] sm:$0xff]
      %v621 = vld [vmem:[%s396 + $0x580] sm:$0xff]
      %v622 = vld [vmem:[%s396 + $0x588] sm:$0xff]
      %v623 = vld [vmem:[%s396 + $0x590] sm:$0xff]
      %v624 = vld [vmem:[%s396 + $0x598] sm:$0xff]
      %v625 = vld [vmem:[%s396 + $0x5a0] sm:$0xff]
      %v626 = vld [vmem:[%s396 + $0x5a8] sm:$0xff]
      %v627 = vld [vmem:[%s396 + $0x5b0] sm:$0xff]
      %v628 = vld [vmem:[%s396 + $0x5b8] sm:$0xff]
      %v629 = vld [vmem:[%s396 + $0x5c0] sm:$0xff]
      %v630 = vld [vmem:[%s396 + $0x5c8] sm:$0xff]
      %v631 = vld [vmem:[%s396 + $0x5d0] sm:$0xff]
      %v632 = vld [vmem:[%s396 + $0x5d8] sm:$0xff]
      %v633 = vld [vmem:[%s396 + $0x5e0] sm:$0xff]
      %v634 = vld [vmem:[%s396 + $0x5e8] sm:$0xff]
      %v635 = vld [vmem:[%s396 + $0x5f0] sm:$0xff]
      %v636 = vld [vmem:[%s396 + $0x5f8] sm:$0xff]
      %v637 = vld [vmem:[%s396 + $0x600] sm:$0xff]
      %v638 = vld [vmem:[%s396 + $0x608] sm:$0xff]
      %v639 = vld [vmem:[%s396 + $0x610] sm:$0xff]
      %v640 = vld [vmem:[%s396 + $0x618] sm:$0xff]
      %v641 = vld [vmem:[%s396 + $0x620] sm:$0xff]
      %v642 = vld [vmem:[%s396 + $0x628] sm:$0xff]
      %v643 = vld [vmem:[%s396 + $0x630] sm:$0xff]
      %v644 = vld [vmem:[%s396 + $0x638] sm:$0xff]
      %v645 = vld [vmem:[%s396 + $0x640] sm:$0xff]
      %v646 = vld [vmem:[%s396 + $0x648] sm:$0xff]
      %v647 = vld [vmem:[%s396 + $0x650] sm:$0xff]
      %v648 = vld [vmem:[%s396 + $0x658] sm:$0xff]
      %v649 = vld [vmem:[%s396 + $0x660] sm:$0xff]
      %v650 = vld [vmem:[%s396 + $0x668] sm:$0xff]
      %v651 = vld [vmem:[%s396 + $0x670] sm:$0xff]
      %v652 = vld [vmem:[%s396 + $0x678] sm:$0xff]
      %v653 = vld [vmem:[%s396 + $0x680] sm:$0xff]
      %v654 = vld [vmem:[%s396 + $0x688] sm:$0xff]
      %v655 = vld [vmem:[%s396 + $0x690] sm:$0xff]
      %v656 = vld [vmem:[%s396 + $0x698] sm:$0xff]
      %v657 = vld [vmem:[%s396 + $0x6a0] sm:$0xff]
      %v658 = vld [vmem:[%s396 + $0x6a8] sm:$0xff]
      %v659 = vld [vmem:[%s396 + $0x6b0] sm:$0xff]
      %v660 = vld [vmem:[%s396 + $0x6b8] sm:$0xff]
      %v661 = vld [vmem:[%s396 + $0x6c0] sm:$0xff]
      %v662 = vld [vmem:[%s396 + $0x6c8] sm:$0xff]
      %v663 = vld [vmem:[%s396 + $0x6d0] sm:$0xff]
      %v664 = vld [vmem:[%s396 + $0x6d8] sm:$0xff]
      %v665 = vld [vmem:[%s396 + $0x6e0] sm:$0xff]
      %v666 = vld [vmem:[%s396 + $0x6e8] sm:$0xff]
      %v667 = vld [vmem:[%s396 + $0x6f0] sm:$0xff]
      %v668 = vld [vmem:[%s396 + $0x6f8] sm:$0xff]
      %v669 = vld [vmem:[%s396 + $0x700] sm:$0xff]
      %v670 = vld [vmem:[%s396 + $0x708] sm:$0xff]
      %v671 = vld [vmem:[%s396 + $0x710] sm:$0xff]
      %v672 = vld [vmem:[%s396 + $0x718] sm:$0xff]
      %v673 = vld [vmem:[%s396 + $0x720] sm:$0xff]
      %v674 = vld [vmem:[%s396 + $0x728] sm:$0xff]
      %v675 = vld [vmem:[%s396 + $0x730] sm:$0xff]
      %v676 = vld [vmem:[%s396 + $0x738] sm:$0xff]
      %v677 = vld [vmem:[%s396 + $0x740] sm:$0xff]
      %v678 = vld [vmem:[%s396 + $0x748] sm:$0xff]
      %v679 = vld [vmem:[%s396 + $0x750] sm:$0xff]
      %v680 = vld [vmem:[%s396 + $0x758] sm:$0xff]
      %v681 = vld [vmem:[%s396 + $0x760] sm:$0xff]
      %v682 = vld [vmem:[%s396 + $0x768] sm:$0xff]
      %v683 = vld [vmem:[%s396 + $0x770] sm:$0xff]
      %v684 = vld [vmem:[%s396 + $0x778] sm:$0xff]
      %v685 = vld [vmem:[%s396 + $0x780] sm:$0xff]
      %v686 = vld [vmem:[%s396 + $0x788] sm:$0xff]
      %v687 = vld [vmem:[%s396 + $0x790] sm:$0xff]
      %v688 = vld [vmem:[%s396 + $0x798] sm:$0xff]
      %v689 = vld [vmem:[%s396 + $0x7a0] sm:$0xff]
      %v690 = vld [vmem:[%s396 + $0x7a8] sm:$0xff]
      %v691 = vld [vmem:[%s396 + $0x7b0] sm:$0xff]
      %v692 = vld [vmem:[%s396 + $0x7b8] sm:$0xff]
      %v693 = vld [vmem:[%s396 + $0x7c0] sm:$0xff]
      %v694 = vld [vmem:[%s396 + $0x7c8] sm:$0xff]
      %v695 = vld [vmem:[%s396 + $0x7d0] sm:$0xff]
      %v696 = vld [vmem:[%s396 + $0x7d8] sm:$0xff]
      %v697 = vld [vmem:[%s396 + $0x7e0] sm:$0xff]
      %v698 = vld [vmem:[%s396 + $0x7e8] sm:$0xff]
      %v699 = vld [vmem:[%s396 + $0x7f0] sm:$0xff]
      %v700 = vld [vmem:[%s396 + $0x7f8] sm:$0xff]
      %v701 = vpack.c.bf16 %v447, %v445
      %v702 = vpack.c.bf16 %v448, %v446
      %v703 = vpack.c.bf16 %v451, %v449
      %v704 = vpack.c.bf16 %v452, %v450
      %v705 = vpack.c.bf16 %v455, %v453
      %v706 = vpack.c.bf16 %v456, %v454
      %v707 = vpack.c.bf16 %v459, %v457
      %v708 = vpack.c.bf16 %v460, %v458
      %v709 = vpack.c.bf16 %v463, %v461
      %v710 = vpack.c.bf16 %v464, %v462
      %v711 = vpack.c.bf16 %v467, %v465
      %v712 = vpack.c.bf16 %v468, %v466
      %v713 = vpack.c.bf16 %v471, %v469
      %v714 = vpack.c.bf16 %v472, %v470
      %v715 = vpack.c.bf16 %v475, %v473
      %v716 = vpack.c.bf16 %v476, %v474
      %v717 = vpack.c.bf16 %v479, %v477
      %v718 = vpack.c.bf16 %v480, %v478
      %v719 = vpack.c.bf16 %v483, %v481
      %v720 = vpack.c.bf16 %v484, %v482
      %v721 = vpack.c.bf16 %v487, %v485
      %v722 = vpack.c.bf16 %v488, %v486
      %v723 = vpack.c.bf16 %v491, %v489
      %v724 = vpack.c.bf16 %v492, %v490
      %v725 = vpack.c.bf16 %v495, %v493
      %v726 = vpack.c.bf16 %v496, %v494
      %v727 = vpack.c.bf16 %v499, %v497
      %v728 = vpack.c.bf16 %v500, %v498
      %v729 = vpack.c.bf16 %v503, %v501
      %v730 = vpack.c.bf16 %v504, %v502
      %v731 = vpack.c.bf16 %v507, %v505
      %v732 = vpack.c.bf16 %v508, %v506
      %v733 = vpack.c.bf16 %v511, %v509
      %v734 = vpack.c.bf16 %v512, %v510
      %v735 = vpack.c.bf16 %v515, %v513
      %v736 = vpack.c.bf16 %v516, %v514
      %v737 = vpack.c.bf16 %v519, %v517
      %v738 = vpack.c.bf16 %v520, %v518
      %v739 = vpack.c.bf16 %v523, %v521
      %v740 = vpack.c.bf16 %v524, %v522
      %v741 = vpack.c.bf16 %v527, %v525
      %v742 = vpack.c.bf16 %v528, %v526
      %v743 = vpack.c.bf16 %v531, %v529
      %v744 = vpack.c.bf16 %v532, %v530
      %v745 = vpack.c.bf16 %v535, %v533
      %v746 = vpack.c.bf16 %v536, %v534
      %v747 = vpack.c.bf16 %v539, %v537
      %v748 = vpack.c.bf16 %v540, %v538
      %v749 = vpack.c.bf16 %v543, %v541
      %v750 = vpack.c.bf16 %v544, %v542
      %v751 = vpack.c.bf16 %v547, %v545
      %v752 = vpack.c.bf16 %v548, %v546
      %v753 = vpack.c.bf16 %v551, %v549
      %v754 = vpack.c.bf16 %v552, %v550
      %v755 = vpack.c.bf16 %v555, %v553
      %v756 = vpack.c.bf16 %v556, %v554
      %v757 = vpack.c.bf16 %v559, %v557
      %v758 = vpack.c.bf16 %v560, %v558
      %v759 = vpack.c.bf16 %v563, %v561
      %v760 = vpack.c.bf16 %v564, %v562
      %v761 = vpack.c.bf16 %v567, %v565
      %v762 = vpack.c.bf16 %v568, %v566
      %v763 = vpack.c.bf16 %v571, %v569
      %v764 = vpack.c.bf16 %v572, %v570
      %v765 = vpack.c.bf16 %v575, %v573
      %v766 = vpack.c.bf16 %v576, %v574
      %v767 = vpack.c.bf16 %v579, %v577
      %v768 = vpack.c.bf16 %v580, %v578
      %v769 = vpack.c.bf16 %v583, %v581
      %v770 = vpack.c.bf16 %v584, %v582
      %v771 = vpack.c.bf16 %v587, %v585
      %v772 = vpack.c.bf16 %v588, %v586
      %v773 = vpack.c.bf16 %v591, %v589
      %v774 = vpack.c.bf16 %v592, %v590
      %v775 = vpack.c.bf16 %v595, %v593
      %v776 = vpack.c.bf16 %v596, %v594
      %v777 = vpack.c.bf16 %v599, %v597
      %v778 = vpack.c.bf16 %v600, %v598
      %v779 = vpack.c.bf16 %v603, %v601
      %v780 = vpack.c.bf16 %v604, %v602
      %v781 = vpack.c.bf16 %v607, %v605
      %v782 = vpack.c.bf16 %v608, %v606
      %v783 = vpack.c.bf16 %v611, %v609
      %v784 = vpack.c.bf16 %v612, %v610
      %v785 = vpack.c.bf16 %v615, %v613
      %v786 = vpack.c.bf16 %v616, %v614
      %v787 = vpack.c.bf16 %v619, %v617
      %v788 = vpack.c.bf16 %v620, %v618
      %v789 = vpack.c.bf16 %v623, %v621
      %v790 = vpack.c.bf16 %v624, %v622
      %v791 = vpack.c.bf16 %v627, %v625
      %v792 = vpack.c.bf16 %v628, %v626
      %v793 = vpack.c.bf16 %v631, %v629
      %v794 = vpack.c.bf16 %v632, %v630
      %v795 = vpack.c.bf16 %v635, %v633
      %v796 = vpack.c.bf16 %v636, %v634
      %v797 = vpack.c.bf16 %v639, %v637
      %v798 = vpack.c.bf16 %v640, %v638
      %v799 = vpack.c.bf16 %v643, %v641
      %v800 = vpack.c.bf16 %v644, %v642
      %v801 = vpack.c.bf16 %v647, %v645
      %v802 = vpack.c.bf16 %v648, %v646
      %v803 = vpack.c.bf16 %v651, %v649
      %v804 = vpack.c.bf16 %v652, %v650
      %v805 = vpack.c.bf16 %v655, %v653
      %v806 = vpack.c.bf16 %v656, %v654
      %v807 = vpack.c.bf16 %v659, %v657
      %v808 = vpack.c.bf16 %v660, %v658
      %v809 = vpack.c.bf16 %v663, %v661
      %v810 = vpack.c.bf16 %v664, %v662
      %v811 = vpack.c.bf16 %v667, %v665
      %v812 = vpack.c.bf16 %v668, %v666
      %v813 = vpack.c.bf16 %v671, %v669
      %v814 = vpack.c.bf16 %v672, %v670
      %v815 = vpack.c.bf16 %v675, %v673
      %v816 = vpack.c.bf16 %v676, %v674
      %v817 = vpack.c.bf16 %v679, %v677
      %v818 = vpack.c.bf16 %v680, %v678
      %v819 = vpack.c.bf16 %v683, %v681
      %v820 = vpack.c.bf16 %v684, %v682
      %v821 = vpack.c.bf16 %v687, %v685
      %v822 = vpack.c.bf16 %v688, %v686
      %v823 = vpack.c.bf16 %v691, %v689
      %v824 = vpack.c.bf16 %v692, %v690
      %v825 = vpack.c.bf16 %v695, %v693
      %v826 = vpack.c.bf16 %v696, %v694
      %v827 = vpack.c.bf16 %v699, %v697
      %v828 = vpack.c.bf16 %v700, %v698
      %v829 = vld [vmem:[%s400] sm:$0x3]
      %v831 = vlaneseq
      %v832 = vshrl.u32 %v831, 7
      %v833 = vsub.s32 0, %v832
      %v834 = vrot.slane %v829, %v833
      %v835 = vlaneseq
      %v836 = vshrl.u32 %v835, 7
      %v837 = vsub.s32 1, %v836
      %v838 = vrot.slane %v829, %v837
      %841 = vmatprep.subr.bf16.mxu0 %v702
      %842 = vmatpush1.bf16.msra.mxu0 %v701
      %843 = vmatprep.subr.bf16.mxu0 %v704
      %844 = vmatpush1.bf16.msra.mxu0 %v703
      %845 = vmatprep.subr.bf16.mxu0 %v706
      %846 = vmatpush1.bf16.msra.mxu0 %v705
      %847 = vmatprep.subr.bf16.mxu0 %v708
      %848 = vmatpush1.bf16.msra.mxu0 %v707
      %849 = vmatprep.subr.bf16.mxu0 %v710
      %850 = vmatpush1.bf16.msra.mxu0 %v709
      %851 = vmatprep.subr.bf16.mxu0 %v712
      %852 = vmatpush1.bf16.msra.mxu0 %v711
      %853 = vmatprep.subr.bf16.mxu0 %v714
      %854 = vmatpush1.bf16.msra.mxu0 %v713
      %855 = vmatprep.subr.bf16.mxu0 %v716
      %856 = vmatpush1.bf16.msra.mxu0 %v715
      %857 = vmatprep.subr.bf16.mxu0 %v718
      %858 = vmatpush1.bf16.msra.mxu0 %v717
      %859 = vmatprep.subr.bf16.mxu0 %v720
      %860 = vmatpush1.bf16.msra.mxu0 %v719
      %861 = vmatprep.subr.bf16.mxu0 %v722
      %862 = vmatpush1.bf16.msra.mxu0 %v721
      %863 = vmatprep.subr.bf16.mxu0 %v724
      %864 = vmatpush1.bf16.msra.mxu0 %v723
      %865 = vmatprep.subr.bf16.mxu0 %v726
      %866 = vmatpush1.bf16.msra.mxu0 %v725
      %867 = vmatprep.subr.bf16.mxu0 %v728
      %868 = vmatpush1.bf16.msra.mxu0 %v727
      %869 = vmatprep.subr.bf16.mxu0 %v730
      %870 = vmatpush1.bf16.msra.mxu0 %v729
      %871 = vmatprep.subr.bf16.mxu0 %v732
      %872 = vmatpush1.bf16.msra.mxu0 %v731
      %873 = vmatprep.mubr.bf16.mxu0 %v438
      %874 = vmatmul.mubr.bf16.gmra.mrb[0].mxu0 %v437
      %v875 = vpop.f32.mrb[0].mxu0
      %v876 = vadd.f32 %v834, %v875
      %v877 = vpop.f32.mrb[0].mxu0
      %v878 = vadd.f32 %v838, %v877
      %v879 = vpop.f32.mrb[0].mxu0
      %v880 = vpop.f32.mrb[0].mxu0
      %881 = vdwg.mxu0
      %882 = vmatprep.subr.bf16.mxu0 %v734
      %883 = vmatpush1.bf16.msra.mxu0 %v733
      %884 = vmatprep.subr.bf16.mxu0 %v736
      %885 = vmatpush1.bf16.msra.mxu0 %v735
      %886 = vmatprep.subr.bf16.mxu0 %v738
      %887 = vmatpush1.bf16.msra.mxu0 %v737
      %888 = vmatprep.subr.bf16.mxu0 %v740
      %889 = vmatpush1.bf16.msra.mxu0 %v739
      %890 = vmatprep.subr.bf16.mxu0 %v742
      %891 = vmatpush1.bf16.msra.mxu0 %v741
      %892 = vmatprep.subr.bf16.mxu0 %v744
      %893 = vmatpush1.bf16.msra.mxu0 %v743
      %894 = vmatprep.subr.bf16.mxu0 %v746
      %895 = vmatpush1.bf16.msra.mxu0 %v745
      %896 = vmatprep.subr.bf16.mxu0 %v748
      %897 = vmatpush1.bf16.msra.mxu0 %v747
      %898 = vmatprep.subr.bf16.mxu0 %v750
      %899 = vmatpush1.bf16.msra.mxu0 %v749
      %900 = vmatprep.subr.bf16.mxu0 %v752
      %901 = vmatpush1.bf16.msra.mxu0 %v751
      %902 = vmatprep.subr.bf16.mxu0 %v754
      %903 = vmatpush1.bf16.msra.mxu0 %v753
      %904 = vmatprep.subr.bf16.mxu0 %v756
      %905 = vmatpush1.bf16.msra.mxu0 %v755
      %906 = vmatprep.subr.bf16.mxu0 %v758
      %907 = vmatpush1.bf16.msra.mxu0 %v757
      %908 = vmatprep.subr.bf16.mxu0 %v760
      %909 = vmatpush1.bf16.msra.mxu0 %v759
      %910 = vmatprep.subr.bf16.mxu0 %v762
      %911 = vmatpush1.bf16.msra.mxu0 %v761
      %912 = vmatprep.subr.bf16.mxu0 %v764
      %913 = vmatpush1.bf16.msra.mxu0 %v763
      %914 = vmatprep.mubr.bf16.mxu0 %v440
      %915 = vmatmul.mubr.bf16.gmra.mrb[0].mxu0 %v439
      %v916 = vpop.f32.mrb[0].mxu0
      %v917 = vadd.f32 %v876, %v916
      %v918 = vpop.f32.mrb[0].mxu0
      %v919 = vadd.f32 %v878, %v918
      %v920 = vpop.f32.mrb[0].mxu0
      %v921 = vpop.f32.mrb[0].mxu0
      %922 = vdwg.mxu0
      %923 = vmatprep.subr.bf16.mxu0 %v766
      %924 = vmatpush1.bf16.msra.mxu0 %v765
      %925 = vmatprep.subr.bf16.mxu0 %v768
      %926 = vmatpush1.bf16.msra.mxu0 %v767
      %927 = vmatprep.subr.bf16.mxu0 %v770
      %928 = vmatpush1.bf16.msra.mxu0 %v769
      %929 = vmatprep.subr.bf16.mxu0 %v772
      %930 = vmatpush1.bf16.msra.mxu0 %v771
      %931 = vmatprep.subr.bf16.mxu0 %v774
      %932 = vmatpush1.bf16.msra.mxu0 %v773
      %933 = vmatprep.subr.bf16.mxu0 %v776
      %934 = vmatpush1.bf16.msra.mxu0 %v775
      %935 = vmatprep.subr.bf16.mxu0 %v778
      %936 = vmatpush1.bf16.msra.mxu0 %v777
      %937 = vmatprep.subr.bf16.mxu0 %v780
      %938 = vmatpush1.bf16.msra.mxu0 %v779
      %939 = vmatprep.subr.bf16.mxu0 %v782
      %940 = vmatpush1.bf16.msra.mxu0 %v781
      %941 = vmatprep.subr.bf16.mxu0 %v784
      %942 = vmatpush1.bf16.msra.mxu0 %v783
      %943 = vmatprep.subr.bf16.mxu0 %v786
      %944 = vmatpush1.bf16.msra.mxu0 %v785
      %945 = vmatprep.subr.bf16.mxu0 %v788
      %946 = vmatpush1.bf16.msra.mxu0 %v787
      %947 = vmatprep.subr.bf16.mxu0 %v790
      %948 = vmatpush1.bf16.msra.mxu0 %v789
      %949 = vmatprep.subr.bf16.mxu0 %v792
      %950 = vmatpush1.bf16.msra.mxu0 %v791
      %951 = vmatprep.subr.bf16.mxu0 %v794
      %952 = vmatpush1.bf16.msra.mxu0 %v793
      %953 = vmatprep.subr.bf16.mxu0 %v796
      %954 = vmatpush1.bf16.msra.mxu0 %v795
      %955 = vmatprep.mubr.bf16.mxu0 %v442
      %956 = vmatmul.mubr.bf16.gmra.mrb[0].mxu0 %v441
      %v957 = vpop.f32.mrb[0].mxu0
      %v958 = vadd.f32 %v917, %v957
      %v959 = vpop.f32.mrb[0].mxu0
      %v960 = vadd.f32 %v919, %v959
      %v961 = vpop.f32.mrb[0].mxu0
      %v962 = vpop.f32.mrb[0].mxu0
      %963 = vdwg.mxu0
      %964 = vmatprep.subr.bf16.mxu0 %v798
      %965 = vmatpush1.bf16.msra.mxu0 %v797
      %966 = vmatprep.subr.bf16.mxu0 %v800
      %967 = vmatpush1.bf16.msra.mxu0 %v799
      %968 = vmatprep.subr.bf16.mxu0 %v802
      %969 = vmatpush1.bf16.msra.mxu0 %v801
      %970 = vmatprep.subr.bf16.mxu0 %v804
      %971 = vmatpush1.bf16.msra.mxu0 %v803
      %972 = vmatprep.subr.bf16.mxu0 %v806
      %973 = vmatpush1.bf16.msra.mxu0 %v805
      %974 = vmatprep.subr.bf16.mxu0 %v808
      %975 = vmatpush1.bf16.msra.mxu0 %v807
      %976 = vmatprep.subr.bf16.mxu0 %v810
      %977 = vmatpush1.bf16.msra.mxu0 %v809
      %978 = vmatprep.subr.bf16.mxu0 %v812
      %979 = vmatpush1.bf16.msra.mxu0 %v811
      %980 = vmatprep.subr.bf16.mxu0 %v814
      %981 = vmatpush1.bf16.msra.mxu0 %v813
      %982 = vmatprep.subr.bf16.mxu0 %v816
      %983 = vmatpush1.bf16.msra.mxu0 %v815
      %984 = vmatprep.subr.bf16.mxu0 %v818
      %985 = vmatpush1.bf16.msra.mxu0 %v817
      %986 = vmatprep.subr.bf16.mxu0 %v820
      %987 = vmatpush1.bf16.msra.mxu0 %v819
      %988 = vmatprep.subr.bf16.mxu0 %v822
      %989 = vmatpush1.bf16.msra.mxu0 %v821
      %990 = vmatprep.subr.bf16.mxu0 %v824
      %991 = vmatpush1.bf16.msra.mxu0 %v823
      %992 = vmatprep.subr.bf16.mxu0 %v826
      %993 = vmatpush1.bf16.msra.mxu0 %v825
      %994 = vmatprep.subr.bf16.mxu0 %v828
      %995 = vmatpush1.bf16.msra.mxu0 %v827
      %996 = vmatprep.mubr.bf16.mxu0 %v444
      %997 = vmatmul.mubr.bf16.gmra.mrb[0].mxu0 %v443
      %v998 = vpop.f32.mrb[0].mxu0
      %v999 = vadd.f32 %v958, %v998
      %v1000 = vpop.f32.mrb[0].mxu0
      %v1001 = vadd.f32 %v960, %v1000
      %v1002 = vpop.f32.mrb[0].mxu0
      %v1003 = vpop.f32.mrb[0].mxu0
      %1004 = vdwg.mxu0
      %v1005 = vmax.f32 %v999, 0.0
      %v1006 = vmax.f32 %v1001, 0.0
      %1007 = vst [vmem:[%s423] sm:$0xff] %v1005
      %1008 = vst [vmem:[%s423 + $0x8] sm:$0xff] %v1006
      %v1009 = vpack.c.bf16 %v1005, %v1005
      %v1010 = vpack.c.bf16 %v1006, %v1006
      %v1011 = vld [vmem:[%s405] sm:$0xff]
      %v1012 = vld [vmem:[%s405 + $0x8] sm:$0xff]
      %v1013 = vld [vmem:[%s405 + $0x10] sm:$0xff]
      %v1014 = vld [vmem:[%s405 + $0x18] sm:$0xff]
      %v1015 = vld [vmem:[%s405 + $0x20] sm:$0xff]
      %v1016 = vld [vmem:[%s405 + $0x28] sm:$0xff]
      %v1017 = vld [vmem:[%s405 + $0x30] sm:$0xff]
      %v1018 = vld [vmem:[%s405 + $0x38] sm:$0xff]
      %v1019 = vld [vmem:[%s405 + $0x40] sm:$0xff]
      %v1020 = vld [vmem:[%s405 + $0x48] sm:$0xff]
      %v1021 = vld [vmem:[%s405 + $0x50] sm:$0xff]
      %v1022 = vld [vmem:[%s405 + $0x58] sm:$0xff]
      %v1023 = vld [vmem:[%s405 + $0x60] sm:$0xff]
      %v1024 = vld [vmem:[%s405 + $0x68] sm:$0xff]
      %v1025 = vld [vmem:[%s405 + $0x70] sm:$0xff]
      %v1026 = vld [vmem:[%s405 + $0x78] sm:$0xff]
      %v1027 = vld [vmem:[%s405 + $0x80] sm:$0xff]
      %v1028 = vld [vmem:[%s405 + $0x88] sm:$0xff]
      %v1029 = vld [vmem:[%s405 + $0x90] sm:$0xff]
      %v1030 = vld [vmem:[%s405 + $0x98] sm:$0xff]
      %v1031 = vld [vmem:[%s405 + $0xa0] sm:$0xff]
      %v1032 = vld [vmem:[%s405 + $0xa8] sm:$0xff]
      %v1033 = vld [vmem:[%s405 + $0xb0] sm:$0xff]
      %v1034 = vld [vmem:[%s405 + $0xb8] sm:$0xff]
      %v1035 = vld [vmem:[%s405 + $0xc0] sm:$0xff]
      %v1036 = vld [vmem:[%s405 + $0xc8] sm:$0xff]
      %v1037 = vld [vmem:[%s405 + $0xd0] sm:$0xff]
      %v1038 = vld [vmem:[%s405 + $0xd8] sm:$0xff]
      %v1039 = vld [vmem:[%s405 + $0xe0] sm:$0xff]
      %v1040 = vld [vmem:[%s405 + $0xe8] sm:$0xff]
      %v1041 = vld [vmem:[%s405 + $0xf0] sm:$0xff]
      %v1042 = vld [vmem:[%s405 + $0xf8] sm:$0xff]
      %v1043 = vld [vmem:[%s405 + $0x100] sm:$0xff]
      %v1044 = vld [vmem:[%s405 + $0x108] sm:$0xff]
      %v1045 = vld [vmem:[%s405 + $0x110] sm:$0xff]
      %v1046 = vld [vmem:[%s405 + $0x118] sm:$0xff]
      %v1047 = vld [vmem:[%s405 + $0x120] sm:$0xff]
      %v1048 = vld [vmem:[%s405 + $0x128] sm:$0xff]
      %v1049 = vld [vmem:[%s405 + $0x130] sm:$0xff]
      %v1050 = vld [vmem:[%s405 + $0x138] sm:$0xff]
      %v1051 = vld [vmem:[%s405 + $0x140] sm:$0xff]
      %v1052 = vld [vmem:[%s405 + $0x148] sm:$0xff]
      %v1053 = vld [vmem:[%s405 + $0x150] sm:$0xff]
      %v1054 = vld [vmem:[%s405 + $0x158] sm:$0xff]
      %v1055 = vld [vmem:[%s405 + $0x160] sm:$0xff]
      %v1056 = vld [vmem:[%s405 + $0x168] sm:$0xff]
      %v1057 = vld [vmem:[%s405 + $0x170] sm:$0xff]
      %v1058 = vld [vmem:[%s405 + $0x178] sm:$0xff]
      %v1059 = vld [vmem:[%s405 + $0x180] sm:$0xff]
      %v1060 = vld [vmem:[%s405 + $0x188] sm:$0xff]
      %v1061 = vld [vmem:[%s405 + $0x190] sm:$0xff]
      %v1062 = vld [vmem:[%s405 + $0x198] sm:$0xff]
      %v1063 = vld [vmem:[%s405 + $0x1a0] sm:$0xff]
      %v1064 = vld [vmem:[%s405 + $0x1a8] sm:$0xff]
      %v1065 = vld [vmem:[%s405 + $0x1b0] sm:$0xff]
      %v1066 = vld [vmem:[%s405 + $0x1b8] sm:$0xff]
      %v1067 = vld [vmem:[%s405 + $0x1c0] sm:$0xff]
      %v1068 = vld [vmem:[%s405 + $0x1c8] sm:$0xff]
      %v1069 = vld [vmem:[%s405 + $0x1d0] sm:$0xff]
      %v1070 = vld [vmem:[%s405 + $0x1d8] sm:$0xff]
      %v1071 = vld [vmem:[%s405 + $0x1e0] sm:$0xff]
      %v1072 = vld [vmem:[%s405 + $0x1e8] sm:$0xff]
      %v1073 = vld [vmem:[%s405 + $0x1f0] sm:$0xff]
      %v1074 = vld [vmem:[%s405 + $0x1f8] sm:$0xff]
      %v1075 = vpack.c.bf16 %v1013, %v1011
      %v1076 = vpack.c.bf16 %v1014, %v1012
      %v1077 = vpack.c.bf16 %v1017, %v1015
      %v1078 = vpack.c.bf16 %v1018, %v1016
      %v1079 = vpack.c.bf16 %v1021, %v1019
      %v1080 = vpack.c.bf16 %v1022, %v1020
      %v1081 = vpack.c.bf16 %v1025, %v1023
      %v1082 = vpack.c.bf16 %v1026, %v1024
      %v1083 = vpack.c.bf16 %v1029, %v1027
      %v1084 = vpack.c.bf16 %v1030, %v1028
      %v1085 = vpack.c.bf16 %v1033, %v1031
      %v1086 = vpack.c.bf16 %v1034, %v1032
      %v1087 = vpack.c.bf16 %v1037, %v1035
      %v1088 = vpack.c.bf16 %v1038, %v1036
      %v1089 = vpack.c.bf16 %v1041, %v1039
      %v1090 = vpack.c.bf16 %v1042, %v1040
      %v1091 = vpack.c.bf16 %v1045, %v1043
      %v1092 = vpack.c.bf16 %v1046, %v1044
      %v1093 = vpack.c.bf16 %v1049, %v1047
      %v1094 = vpack.c.bf16 %v1050, %v1048
      %v1095 = vpack.c.bf16 %v1053, %v1051
      %v1096 = vpack.c.bf16 %v1054, %v1052
      %v1097 = vpack.c.bf16 %v1057, %v1055
      %v1098 = vpack.c.bf16 %v1058, %v1056
      %v1099 = vpack.c.bf16 %v1061, %v1059
      %v1100 = vpack.c.bf16 %v1062, %v1060
      %v1101 = vpack.c.bf16 %v1065, %v1063
      %v1102 = vpack.c.bf16 %v1066, %v1064
      %v1103 = vpack.c.bf16 %v1069, %v1067
      %v1104 = vpack.c.bf16 %v1070, %v1068
      %v1105 = vpack.c.bf16 %v1073, %v1071
      %v1106 = vpack.c.bf16 %v1074, %v1072
      %1107 = vmatprep.subr.bf16.mxu0 %v1076
      %1108 = vmatpush1.bf16.msra.mxu0 %v1075
      %1109 = vmatprep.subr.bf16.mxu0 %v1078
      %1110 = vmatpush1.bf16.msra.mxu0 %v1077
      %1111 = vmatprep.subr.bf16.mxu0 %v1080
      %1112 = vmatpush1.bf16.msra.mxu0 %v1079
      %1113 = vmatprep.subr.bf16.mxu0 %v1082
      %1114 = vmatpush1.bf16.msra.mxu0 %v1081
      %1115 = vmatprep.subr.bf16.mxu0 %v1084
      %1116 = vmatpush1.bf16.msra.mxu0 %v1083
      %1117 = vmatprep.subr.bf16.mxu0 %v1086
      %1118 = vmatpush1.bf16.msra.mxu0 %v1085
      %1119 = vmatprep.subr.bf16.mxu0 %v1088
      %1120 = vmatpush1.bf16.msra.mxu0 %v1087
      %1121 = vmatprep.subr.bf16.mxu0 %v1090
      %1122 = vmatpush1.bf16.msra.mxu0 %v1089
      %1123 = vmatprep.subr.bf16.mxu0 %v1092
      %1124 = vmatpush1.bf16.msra.mxu0 %v1091
      %1125 = vmatprep.subr.bf16.mxu0 %v1094
      %1126 = vmatpush1.bf16.msra.mxu0 %v1093
      %1127 = vmatprep.subr.bf16.mxu0 %v1096
      %1128 = vmatpush1.bf16.msra.mxu0 %v1095
      %1129 = vmatprep.subr.bf16.mxu0 %v1098
      %1130 = vmatpush1.bf16.msra.mxu0 %v1097
      %1131 = vmatprep.subr.bf16.mxu0 %v1100
      %1132 = vmatpush1.bf16.msra.mxu0 %v1099
      %1133 = vmatprep.subr.bf16.mxu0 %v1102
      %1134 = vmatpush1.bf16.msra.mxu0 %v1101
      %1135 = vmatprep.subr.bf16.mxu0 %v1104
      %1136 = vmatpush1.bf16.msra.mxu0 %v1103
      %1137 = vmatprep.subr.bf16.mxu0 %v1106
      %1138 = vmatpush1.bf16.msra.mxu0 %v1105
      %1139 = vmatprep.mubr.bf16.mxu0 %v1010
      %1140 = vmatmul.mubr.bf16.gmra.mrb[0].mxu0 %v1009
      %v1141 = vpop.f32.mrb[0].mxu0
      %v1142 = vadd.f32 0.0, %v1141
      %v1143 = vpop.f32.mrb[0].mxu0
      %v1144 = vadd.f32 0.0, %v1143
      %v1145 = vpop.f32.mrb[0].mxu0
      %v1146 = vpop.f32.mrb[0].mxu0
      %1147 = vdwg.mxu0
      %v1148 = vrot.slane %v1142, 4
      %v1149 = vadd.f32 %v1142, %v1148
      %v1150 = vrot.slane %v1149, 2
      %v1151 = vadd.f32 %v1149, %v1150
      %v1152 = vrot.slane %v1151, 1
      %v1153 = vadd.f32 %v1151, %v1152
      %v1154 = vrot.slane %v1144, 4
      %v1155 = vadd.f32 %v1144, %v1154
      %v1156 = vrot.slane %v1155, 2
      %v1157 = vadd.f32 %v1155, %v1156
      %v1158 = vrot.slane %v1157, 1
      %v1159 = vadd.f32 %v1157, %v1158
      %v1160 = vrcp.pop 8.0
      %v1161 = vmul.f32 %v1153, %v1160
      %v1162 = vmul.f32 %v1159, %v1160
      %v1163 = vmul.f32 %v1142, %v1142
      %v1164 = vmul.f32 %v1144, %v1144
      %v1165 = vrot.slane %v1163, 4
      %v1166 = vadd.f32 %v1163, %v1165
      %v1167 = vrot.slane %v1166, 2
      %v1168 = vadd.f32 %v1166, %v1167
      %v1169 = vrot.slane %v1168, 1
      %v1170 = vadd.f32 %v1168, %v1169
      %v1171 = vrot.slane %v1164, 4
      %v1172 = vadd.f32 %v1164, %v1171
      %v1173 = vrot.slane %v1172, 2
      %v1174 = vadd.f32 %v1172, %v1173
      %v1175 = vrot.slane %v1174, 1
      %v1176 = vadd.f32 %v1174, %v1175
      %v1177 = vmul.f32 %v1170, %v1160
      %v1178 = vmul.f32 %v1176, %v1160
      %v1179 = vmul.f32 %v1161, %v1161
      %v1180 = vmul.f32 %v1162, %v1162
      %v1181 = vsub.f32 %v1177, %v1179
      %v1182 = vsub.f32 %v1178, %v1180
      %v1183 = vsub.f32 %v1142, %v1161
      %v1184 = vsub.f32 %v1144, %v1162
      %v1185 = vadd.f32 %v1181, 1e-05
      %v1186 = vadd.f32 %v1182, 1e-05
      %v1187 = vrsqrt.pop %v1185
      %v1188 = vrsqrt.pop %v1186
      %v1189 = vmul.f32 %v1183, %v1187
      %v1190 = vmul.f32 %v1184, %v1188
      %v1191 = vld [vmem:[%s409] sm:$0x3]
      %v1193 = vlaneseq
      %v1194 = vshrl.u32 %v1193, 7
      %v1195 = vsub.s32 0, %v1194
      %v1196 = vrot.slane %v1191, %v1195
      %v1197 = vlaneseq
      %v1198 = vshrl.u32 %v1197, 7
      %v1199 = vsub.s32 1, %v1198
      %v1200 = vrot.slane %v1191, %v1199
      %v1203 = vmul.f32 %v1189, %v1196
      %v1204 = vmul.f32 %v1190, %v1200
      %v1205 = vld [vmem:[%s413] sm:$0x3]
      %v1207 = vlaneseq
      %v1208 = vshrl.u32 %v1207, 7
      %v1209 = vsub.s32 0, %v1208
      %v1210 = vrot.slane %v1205, %v1209
      %v1211 = vlaneseq
      %v1212 = vshrl.u32 %v1211, 7
      %v1213 = vsub.s32 1, %v1212
      %v1214 = vrot.slane %v1205, %v1213
      %v1217 = vadd.f32 %v1203, %v1210
      %v1218 = vadd.f32 %v1204, %v1214
      %v1219 = vmax.f32 %v1217, 0.0
      %v1220 = vmax.f32 %v1218, 0.0
      %v1221 = vpack.c.bf16 %v1219, %v1219
      %v1222 = vpack.c.bf16 %v1220, %v1220
      %v1223 = vld [vmem:[%s418] sm:$0xff]
      %v1224 = vld [vmem:[%s418 + $0x8] sm:$0xff]
      %v1225 = vld [vmem:[%s418 + $0x10] sm:$0xff]
      %v1226 = vld [vmem:[%s418 + $0x18] sm:$0xff]
      %v1227 = vld [vmem:[%s418 + $0x20] sm:$0xff]
      %v1228 = vld [vmem:[%s418 + $0x28] sm:$0xff]
      %v1229 = vld [vmem:[%s418 + $0x30] sm:$0xff]
      %v1230 = vld [vmem:[%s418 + $0x38] sm:$0xff]
      %v1231 = vld [vmem:[%s418 + $0x40] sm:$0xff]
      %v1232 = vld [vmem:[%s418 + $0x48] sm:$0xff]
      %v1233 = vld [vmem:[%s418 + $0x50] sm:$0xff]
      %v1234 = vld [vmem:[%s418 + $0x58] sm:$0xff]
      %v1235 = vld [vmem:[%s418 + $0x60] sm:$0xff]
      %v1236 = vld [vmem:[%s418 + $0x68] sm:$0xff]
      %v1237 = vld [vmem:[%s418 + $0x70] sm:$0xff]
      %v1238 = vld [vmem:[%s418 + $0x78] sm:$0xff]
      %v1239 = vld [vmem:[%s418 + $0x80] sm:$0xff]
      %v1240 = vld [vmem:[%s418 + $0x88] sm:$0xff]
      %v1241 = vld [vmem:[%s418 + $0x90] sm:$0xff]
      %v1242 = vld [vmem:[%s418 + $0x98] sm:$0xff]
      %v1243 = vld [vmem:[%s418 + $0xa0] sm:$0xff]
      %v1244 = vld [vmem:[%s418 + $0xa8] sm:$0xff]
      %v1245 = vld [vmem:[%s418 + $0xb0] sm:$0xff]
      %v1246 = vld [vmem:[%s418 + $0xb8] sm:$0xff]
      %v1247 = vld [vmem:[%s418 + $0xc0] sm:$0xff]
      %v1248 = vld [vmem:[%s418 + $0xc8] sm:$0xff]
      %v1249 = vld [vmem:[%s418 + $0xd0] sm:$0xff]
      %v1250 = vld [vmem:[%s418 + $0xd8] sm:$0xff]
      %v1251 = vld [vmem:[%s418 + $0xe0] sm:$0xff]
      %v1252 = vld [vmem:[%s418 + $0xe8] sm:$0xff]
      %v1253 = vld [vmem:[%s418 + $0xf0] sm:$0xff]
      %v1254 = vld [vmem:[%s418 + $0xf8] sm:$0xff]
      %v1255 = vpack.c.bf16 %v1224, %v1223
      %v1256 = vpack.c.bf16 %v1226, %v1225
      %v1257 = vpack.c.bf16 %v1228, %v1227
      %v1258 = vpack.c.bf16 %v1230, %v1229
      %v1259 = vpack.c.bf16 %v1232, %v1231
      %v1260 = vpack.c.bf16 %v1234, %v1233
      %v1261 = vpack.c.bf16 %v1236, %v1235
      %v1262 = vpack.c.bf16 %v1238, %v1237
      %v1263 = vpack.c.bf16 %v1240, %v1239
      %v1264 = vpack.c.bf16 %v1242, %v1241
      %v1265 = vpack.c.bf16 %v1244, %v1243
      %v1266 = vpack.c.bf16 %v1246, %v1245
      %v1267 = vpack.c.bf16 %v1248, %v1247
      %v1268 = vpack.c.bf16 %v1250, %v1249
      %v1269 = vpack.c.bf16 %v1252, %v1251
      %v1270 = vpack.c.bf16 %v1254, %v1253
      %1271 = vmatprep.subr.bf16.mxu0 0
      %1272 = vmatpush1.bf16.msra.mxu0 %v1255
      %1273 = vmatprep.subr.bf16.mxu0 0
      %1274 = vmatpush1.bf16.msra.mxu0 %v1256
      %1275 = vmatprep.subr.bf16.mxu0 0
      %1276 = vmatpush1.bf16.msra.mxu0 %v1257
      %1277 = vmatprep.subr.bf16.mxu0 0
      %1278 = vmatpush1.bf16.msra.mxu0 %v1258
      %1279 = vmatprep.subr.bf16.mxu0 0
      %1280 = vmatpush1.bf16.msra.mxu0 %v1259
      %1281 = vmatprep.subr.bf16.mxu0 0
      %1282 = vmatpush1.bf16.msra.mxu0 %v1260
      %1283 = vmatprep.subr.bf16.mxu0 0
      %1284 = vmatpush1.bf16.msra.mxu0 %v1261
      %1285 = vmatprep.subr.bf16.mxu0 0
      %1286 = vmatpush1.bf16.msra.mxu0 %v1262
      %1287 = vmatprep.subr.bf16.mxu0 0
      %1288 = vmatpush1.bf16.msra.mxu0 %v1263
      %1289 = vmatprep.subr.bf16.mxu0 0
      %1290 = vmatpush1.bf16.msra.mxu0 %v1264
      %1291 = vmatprep.subr.bf16.mxu0 0
      %1292 = vmatpush1.bf16.msra.mxu0 %v1265
      %1293 = vmatprep.subr.bf16.mxu0 0
      %1294 = vmatpush1.bf16.msra.mxu0 %v1266
      %1295 = vmatprep.subr.bf16.mxu0 0
      %1296 = vmatpush1.bf16.msra.mxu0 %v1267
      %1297 = vmatprep.subr.bf16.mxu0 0
      %1298 = vmatpush1.bf16.msra.mxu0 %v1268
      %1299 = vmatprep.subr.bf16.mxu0 0
      %1300 = vmatpush1.bf16.msra.mxu0 %v1269
      %1301 = vmatprep.subr.bf16.mxu0 0
      %1302 = vmatpush1.bf16.msra.mxu0 %v1270
      %1303 = vmatprep.mubr.bf16.mxu0 %v1222
      %1304 = vmatmul.mubr.bf16.gmra.mrb[0].mxu0 %v1221
      %v1305 = vpop.f32.mrb[0].mxu0
      %v1306 = vadd.f32 0.0, %v1305
      %v1307 = vpop.f32.mrb[0].mxu0
      %v1308 = vpop.f32.mrb[0].mxu0
      %v1309 = vpop.f32.mrb[0].mxu0
      %1310 = vdwg.mxu0
      %v1311 = vrot.slane %v1306, 4
      %v1312 = vadd.f32 %v1306, %v1311
      %v1313 = vrot.slane %v1312, 2
      %v1314 = vadd.f32 %v1312, %v1313
      %v1315 = vrot.slane %v1314, 1
      %v1316 = vadd.f32 %v1314, %v1315
      %v1317 = vmul.f32 %v1316, %v1160
      %v1318 = vmul.f32 %v1306, %v1306
      %v1319 = vrot.slane %v1318, 4
      %v1320 = vadd.f32 %v1318, %v1319
      %v1321 = vrot.slane %v1320, 2
      %v1322 = vadd.f32 %v1320, %v1321
      %v1323 = vrot.slane %v1322, 1
      %v1324 = vadd.f32 %v1322, %v1323
      %v1325 = vmul.f32 %v1324, %v1160
      %v1326 = vmul.f32 %v1317, %v1317
      %v1327 = vsub.f32 %v1325, %v1326
      %v1328 = vsub.f32 %v1306, %v1317
      %v1329 = vadd.f32 %v1327, 1e-05
      %v1330 = vrsqrt.pop %v1329
      %v1331 = vmul.f32 %v1328, %v1330
      %v1332 = vmul.f32 %v1331, %v1331
      %1333 = vadd.xlane.f32.xlu0 %v1332
      %v1334 = vpop.xlane.xlu0 %1333
      %v1335 = vmax.f32 %v1334, 1e-24
      %v1336 = vrsqrt.pop %v1335
      %v1337 = vmul.f32 %v1331, %v1336
      %1338 = vst [vmem:[%s427] sm:$0xff] %v1337
      %p1339 = scmp.lt.s32.totalorder %s20, 1
      %s1340 = scalar_select %p1339, %s20, 1
      %s1341 = smul.addr %s1340, 2
      %s1342 = smul.addr %s1341, 8
      %s1343 = scalar_lea.vmem %s7, %s1342
      %p1344 = scmp.lt.s32.totalorder %s20, 1
      %s1345 = scalar_select %p1344, %s20, 1
      %s1346 = smul.addr %s1345, 8
      %s1347 = scalar_lea.vmem %s8, %s1346
      // Predicated region
      $region49: #{moco_forward.3} parent=47 // pred_check
        %p1348 = pneg %p220
      $region50: #{moco_forward.3} parent=47 // pred_check_branch
        %1350 = sbr.rel (%p1348) target = $region52
      $region51: #{moco_forward.3} parent=47 // pred_region
        _
      $region52: #{moco_forward.3} parent=47 // pred_fallthru
        _
      // Predicated region
      $region53: #{moco_forward.3} parent=47 // pred_check
        %p1351 = pneg %p246
      $region54: #{moco_forward.3} parent=47 // pred_check_branch
        %1353 = sbr.rel (%p1351) target = $region56
      $region55: #{moco_forward.3} parent=47 // pred_region
        _
      $region56: #{moco_forward.3} parent=47 // pred_fallthru
        _
    $region48: #{moco_forward.3} parent=5 // pred_fallthru
      _
    %p1354 = scmp.le.s32.totalorder 2, %s15
    // Predicated region
    $region57: #{moco_forward.3} parent=5 // pred_check
      %p1355 = pneg %p1354
    $region58: #{moco_forward.3} parent=5 // pred_check_branch
      %1357 = sbr.rel (%p1355) target = $region60
    $region59: #{moco_forward.3} parent=5 // pred_region
      %s1358 = ssub.s32 %s15, 2
      // Predicated region
      $region61: #{moco_forward.3} parent=59 // pred_check
        %p1359 = pneg %p226
      $region62: #{moco_forward.3} parent=59 // pred_check_branch
        %1361 = sbr.rel (%p1359) target = $region64
      $region63: #{moco_forward.3} parent=59 // pred_region
        %p1362 = scmp.lt.s32.totalorder %s21, 1
        %s1363 = scalar_select %p1362, %s21, 1
        %s1364 = smul.addr %s1363, 2
        %s1365 = smul.addr %s1364, 8
        %s1366 = scalar_lea.vmem %s7, %s1365
      $region64: #{moco_forward.3} parent=59 // pred_fallthru
        _
      // Predicated region
      $region65: #{moco_forward.3} parent=59 // pred_check
        %p1367 = pneg %p252
      $region66: #{moco_forward.3} parent=59 // pred_check_branch
        %1369 = sbr.rel (%p1367) target = $region68
      $region67: #{moco_forward.3} parent=59 // pred_region
        %p1370 = scmp.lt.s32.totalorder %s21, 1
        %s1371 = scalar_select %p1370, %s21, 1
        %s1372 = smul.addr %s1371, 8
        %s1373 = scalar_lea.vmem %s8, %s1372
      $region68: #{moco_forward.3} parent=59 // pred_fallthru
        _
    $region60: #{moco_forward.3} parent=5 // pred_fallthru
      _
  $region6: #{moco_forward.3} parent=0 // loop_footer
    %s19 = sadd.s32 1, %s15
  $region7: #{moco_forward.3} parent=0 // loop_footer_branch
    %14 = sbr.rel target = $region3
  $region8: #{moco_forward.3} parent=0 // loop_exit
    _

</llo_original>
